<compile_context>
chip_gen: v5e
topology: v5e:2x2
jax: 0.10.0
libtpu: 0.0.40
codegen_flags: <defaults>
</compile_context>

<pallas_src>
import jax
import jax.numpy as jnp
from jax.experimental import pallas as pl
from jax.experimental.pallas import tpu as pltpu

DIMS = [57, 40, 20, 11, 20, 40, 57]
N_LAYERS = len(DIMS) - 1  # 6 Linear layers


def autoencoder_kernel(x_ref,
                       w0, b0, w1, b1, w2, b2, w3, b3, w4, b4, w5, b5,
                       out_ref):
    """Fused 6-layer MLP on one (TB, 57) batch tile.

    x_ref:   (TB, 57)   -- batch on sublanes, features on lanes
    w{i}:    (in, out)  f32 (transposed once in the wrapper; tiny, resident)
    b{i}:    (1, out)   f32 (broadcasts over the batch sublanes)
    out_ref: (TB, 57)
    """
    ws = (w0, w1, w2, w3, w4, w5)
    bs = (b0, b1, b2, b3, b4, b5)

    h = x_ref[...].astype(jnp.float32)                       # (TB, in)
    for i in range(N_LAYERS):
        acc = jnp.dot(h, ws[i][...],
                      preferred_element_type=jnp.float32)    # (TB, out), f32
        h = acc + bs[i][...]                                  # f32 bias add
        if i < N_LAYERS - 1:
            h = jnp.maximum(h, 0.0)                           # ReLU
        else:
            h = jax.nn.sigmoid(h)                             # final Sigmoid
    out_ref[...] = h.astype(out_ref.dtype)


def _round_up(v, m):
    return ((v + m - 1) // m) * m


def autoencoder_forward(x, params, *, tb=4096):
    """x: (B, 57) float32 (bf16 also accepted -> halves input DMA bytes).
    params: list of 6 (W(out, in), b(out,)) pairs in PyTorch nn.Linear layout.
    """
    B, F = x.shape
    assert F == DIMS[0]

    # --- batch-tile selection ------------------------------------------------
    # Multiple of 256 (fills full 256-wide MXU passes on v6e/v7x, 2x128 on v5e),
    # capped at 8192 so double-buffered I/O + f32 intermediates (~1 KB / batch
    # element) stay far below v7x's 32 MiB scoped-VMEM default.
    tb = max(256, min((int(tb) // 256) * 256, 8192))
    # v7x megacore: keep >= 2 grid steps whenever B allows so the "parallel"
    # batch axis splits across both TensorCores.
    tb = min(tb, max(256, _round_up(pl.cdiv(B, 2), 256)))
    # Tiny batches: don't make the tile bigger than the (sublane-rounded) batch.
    tb = min(tb, _round_up(B, 8))
    n_tiles = pl.cdiv(B, tb)

    # --- operands ------------------------------------------------------------
    # Weights are transposed once here (tiny, one-time) to (in, out) so the
    # kernel's matmul is a plain h @ W_T; biases become (1, out) rows that
    # broadcast over the batch sublanes.  All stay resident via index_map (0,0).
    flat = []
    in_specs = [pl.BlockSpec((tb, F), lambda i: (i, 0))]
    for (w, b) in params:
        wt = w.T.astype(jnp.float32)                 # (in, out)
        bt = b.reshape(1, -1).astype(jnp.float32)    # (1, out)
        flat.append(wt)
        flat.append(bt)
        in_specs.append(pl.BlockSpec(wt.shape, lambda i: (0, 0)))
        in_specs.append(pl.BlockSpec(bt.shape, lambda i: (0, 0)))

    out = pl.pallas_call(
        autoencoder_kernel,
        out_shape=jax.ShapeDtypeStruct((B, DIMS[-1]), jnp.float32),
        grid=(n_tiles,),
        in_specs=in_specs,
        out_specs=pl.BlockSpec((tb, DIMS[-1]), lambda i: (i, 0)),
        compiler_params=pltpu.CompilerParams(
            dimension_semantics=("parallel",)),
    )(x, *flat)

    return out


def init_params(key):
    """Deterministic PyTorch-style (Kaiming-uniform-ish) init, (out, in) layout."""
    params = []
    for i in range(N_LAYERS):
        fan_in, fan_out = DIMS[i], DIMS[i + 1]
        key, kw, kb = jax.random.split(key, 3)
        bound = 1.0 / float(fan_in) ** 0.5
        w = jax.random.uniform(kw, (fan_out, fan_in), jnp.float32, -bound, bound)
        b = jax.random.uniform(kb, (fan_out,), jnp.float32, -bound, bound)
        params.append((w, b))
    return params


def reference_forward(x, params):
    """Pure-JAX f32 reference of the same forward pass."""
    h = x
    for i, (w, b) in enumerate(params):
        h = h @ w.T + b
        h = jnp.maximum(h, 0.0) if i < N_LAYERS - 1 else jax.nn.sigmoid(h)
    return h


if __name__ == "__main__":
    key = jax.random.PRNGKey(0)
    kx, kp = jax.random.split(key)

    # B not a multiple of the tile: exercises the unpadded partial-last-block
    # path and (with the >=2-step cap) gives a 2-step parallel grid.
    B = 300
    x = jax.random.uniform(kx, (B, DIMS[0]), jnp.float32)   # (300, 57)
    params = init_params(kp)

    y = autoencoder_forward(x, params)
    jax.block_until_ready(y)

    assert y.shape == (B, DIMS[-1])
    y_ref = reference_forward(x, params)
    # f32 matmul path -> error vs the pure-f32 reference is typically <= 1e-5;
    # tolerance kept loose to be robust to default MXU precision settings.
    assert jnp.allclose(y, y_ref, atol=2e-2, rtol=2e-2), (
        float(jnp.max(jnp.abs(y - y_ref))))

    print("KERNEL_OK")
</pallas_src>

<mosaic_0001>
module attributes {stable_mosaic.version = 11 : i64} {
  func.func @autoencoder_kernel(%arg0: i32, %arg1: memref<256x57xf32, #tpu.memory_space<vmem>>, %arg2: memref<57x40xf32, #tpu.memory_space<vmem>>, %arg3: memref<1x40xf32, #tpu.memory_space<vmem>>, %arg4: memref<40x20xf32, #tpu.memory_space<vmem>>, %arg5: memref<1x20xf32, #tpu.memory_space<vmem>>, %arg6: memref<20x11xf32, #tpu.memory_space<vmem>>, %arg7: memref<1x11xf32, #tpu.memory_space<vmem>>, %arg8: memref<11x20xf32, #tpu.memory_space<vmem>>, %arg9: memref<1x20xf32, #tpu.memory_space<vmem>>, %arg10: memref<20x40xf32, #tpu.memory_space<vmem>>, %arg11: memref<1x40xf32, #tpu.memory_space<vmem>>, %arg12: memref<40x57xf32, #tpu.memory_space<vmem>>, %arg13: memref<1x57xf32, #tpu.memory_space<vmem>>, %arg14: memref<256x57xf32, #tpu.memory_space<vmem>>) attributes {dimension_semantics = [#tpu.dimension_semantics<parallel>], iteration_bounds = array<i64: 2>, scalar_prefetch = 0 : i64, scratch_operands = 0 : i64, tpu.core_type = #tpu.core_type<tc>, window_params = [{transform_indices = @transform_0, window_bounds = array<i64: 256, 57>}, {pipeline_mode = #tpu.pipeline_mode<synchronous>, transform_indices = @transform_1, window_bounds = array<i64: 57, 40>}, {pipeline_mode = #tpu.pipeline_mode<synchronous>, transform_indices = @transform_2, window_bounds = array<i64: 1, 40>}, {pipeline_mode = #tpu.pipeline_mode<synchronous>, transform_indices = @transform_3, window_bounds = array<i64: 40, 20>}, {pipeline_mode = #tpu.pipeline_mode<synchronous>, transform_indices = @transform_4, window_bounds = array<i64: 1, 20>}, {pipeline_mode = #tpu.pipeline_mode<synchronous>, transform_indices = @transform_5, window_bounds = array<i64: 20, 11>}, {pipeline_mode = #tpu.pipeline_mode<synchronous>, transform_indices = @transform_6, window_bounds = array<i64: 1, 11>}, {pipeline_mode = #tpu.pipeline_mode<synchronous>, transform_indices = @transform_7, window_bounds = array<i64: 11, 20>}, {pipeline_mode = #tpu.pipeline_mode<synchronous>, transform_indices = @transform_8, window_bounds = array<i64: 1, 20>}, {pipeline_mode = #tpu.pipeline_mode<synchronous>, transform_indices = @transform_9, window_bounds = array<i64: 20, 40>}, {pipeline_mode = #tpu.pipeline_mode<synchronous>, transform_indices = @transform_10, window_bounds = array<i64: 1, 40>}, {pipeline_mode = #tpu.pipeline_mode<synchronous>, transform_indices = @transform_11, window_bounds = array<i64: 40, 57>}, {pipeline_mode = #tpu.pipeline_mode<synchronous>, transform_indices = @transform_12, window_bounds = array<i64: 1, 57>}, {transform_indices = @transform_13, window_bounds = array<i64: 256, 57>}]} {
    %c0 = arith.constant 0 : index
    %c0_0 = arith.constant 0 : index
    %0 = vector.load %arg1[%c0, %c0_0] : memref<256x57xf32, #tpu.memory_space<vmem>>, vector<256x57xf32>
    %c0_1 = arith.constant 0 : index
    %c0_2 = arith.constant 0 : index
    %1 = vector.load %arg2[%c0_1, %c0_2] : memref<57x40xf32, #tpu.memory_space<vmem>>, vector<57x40xf32>
    %cst = arith.constant dense<0.000000e+00> : vector<256x40xf32>
    %2 = tpu.matmul %0, %1, %cst {dimension_numbers = #tpu.dot_dimension_numbers<[1], [0], [0], [1], [0, 0, 1, 1], [], []>} : vector<256x57xf32>, vector<57x40xf32>, vector<256x40xf32> -> vector<256x40xf32>
    %c0_3 = arith.constant 0 : index
    %c0_4 = arith.constant 0 : index
    %3 = vector.load %arg3[%c0_3, %c0_4] : memref<1x40xf32, #tpu.memory_space<vmem>>, vector<1x40xf32>
    %4 = vector.broadcast %3 : vector<1x40xf32> to vector<256x40xf32>
    %5 = arith.addf %2, %4 : vector<256x40xf32>
    %cst_5 = arith.constant 0.000000e+00 : f32
    %6 = vector.broadcast %cst_5 : f32 to vector<256x40xf32>
    %7 = arith.maximumf %5, %6 : vector<256x40xf32>
    %c0_6 = arith.constant 0 : index
    %c0_7 = arith.constant 0 : index
    %8 = vector.load %arg4[%c0_6, %c0_7] : memref<40x20xf32, #tpu.memory_space<vmem>>, vector<40x20xf32>
    %cst_8 = arith.constant dense<0.000000e+00> : vector<256x20xf32>
    %9 = tpu.matmul %7, %8, %cst_8 {dimension_numbers = #tpu.dot_dimension_numbers<[1], [0], [0], [1], [0, 0, 1, 1], [], []>} : vector<256x40xf32>, vector<40x20xf32>, vector<256x20xf32> -> vector<256x20xf32>
    %c0_9 = arith.constant 0 : index
    %c0_10 = arith.constant 0 : index
    %10 = vector.load %arg5[%c0_9, %c0_10] : memref<1x20xf32, #tpu.memory_space<vmem>>, vector<1x20xf32>
    %11 = vector.broadcast %10 : vector<1x20xf32> to vector<256x20xf32>
    %12 = arith.addf %9, %11 : vector<256x20xf32>
    %cst_11 = arith.constant 0.000000e+00 : f32
    %13 = vector.broadcast %cst_11 : f32 to vector<256x20xf32>
    %14 = arith.maximumf %12, %13 : vector<256x20xf32>
    %c0_12 = arith.constant 0 : index
    %c0_13 = arith.constant 0 : index
    %15 = vector.load %arg6[%c0_12, %c0_13] : memref<20x11xf32, #tpu.memory_space<vmem>>, vector<20x11xf32>
    %cst_14 = arith.constant dense<0.000000e+00> : vector<256x11xf32>
    %16 = tpu.matmul %14, %15, %cst_14 {dimension_numbers = #tpu.dot_dimension_numbers<[1], [0], [0], [1], [0, 0, 1, 1], [], []>} : vector<256x20xf32>, vector<20x11xf32>, vector<256x11xf32> -> vector<256x11xf32>
    %c0_15 = arith.constant 0 : index
    %c0_16 = arith.constant 0 : index
    %17 = vector.load %arg7[%c0_15, %c0_16] : memref<1x11xf32, #tpu.memory_space<vmem>>, vector<1x11xf32>
    %18 = vector.broadcast %17 : vector<1x11xf32> to vector<256x11xf32>
    %19 = arith.addf %16, %18 : vector<256x11xf32>
    %cst_17 = arith.constant 0.000000e+00 : f32
    %20 = vector.broadcast %cst_17 : f32 to vector<256x11xf32>
    %21 = arith.maximumf %19, %20 : vector<256x11xf32>
    %c0_18 = arith.constant 0 : index
    %c0_19 = arith.constant 0 : index
    %22 = vector.load %arg8[%c0_18, %c0_19] : memref<11x20xf32, #tpu.memory_space<vmem>>, vector<11x20xf32>
    %cst_20 = arith.constant dense<0.000000e+00> : vector<256x20xf32>
    %23 = tpu.matmul %21, %22, %cst_20 {dimension_numbers = #tpu.dot_dimension_numbers<[1], [0], [0], [1], [0, 0, 1, 1], [], []>} : vector<256x11xf32>, vector<11x20xf32>, vector<256x20xf32> -> vector<256x20xf32>
    %c0_21 = arith.constant 0 : index
    %c0_22 = arith.constant 0 : index
    %24 = vector.load %arg9[%c0_21, %c0_22] : memref<1x20xf32, #tpu.memory_space<vmem>>, vector<1x20xf32>
    %25 = vector.broadcast %24 : vector<1x20xf32> to vector<256x20xf32>
    %26 = arith.addf %23, %25 : vector<256x20xf32>
    %cst_23 = arith.constant 0.000000e+00 : f32
    %27 = vector.broadcast %cst_23 : f32 to vector<256x20xf32>
    %28 = arith.maximumf %26, %27 : vector<256x20xf32>
    %c0_24 = arith.constant 0 : index
    %c0_25 = arith.constant 0 : index
    %29 = vector.load %arg10[%c0_24, %c0_25] : memref<20x40xf32, #tpu.memory_space<vmem>>, vector<20x40xf32>
    %cst_26 = arith.constant dense<0.000000e+00> : vector<256x40xf32>
    %30 = tpu.matmul %28, %29, %cst_26 {dimension_numbers = #tpu.dot_dimension_numbers<[1], [0], [0], [1], [0, 0, 1, 1], [], []>} : vector<256x20xf32>, vector<20x40xf32>, vector<256x40xf32> -> vector<256x40xf32>
    %c0_27 = arith.constant 0 : index
    %c0_28 = arith.constant 0 : index
    %31 = vector.load %arg11[%c0_27, %c0_28] : memref<1x40xf32, #tpu.memory_space<vmem>>, vector<1x40xf32>
    %32 = vector.broadcast %31 : vector<1x40xf32> to vector<256x40xf32>
    %33 = arith.addf %30, %32 : vector<256x40xf32>
    %cst_29 = arith.constant 0.000000e+00 : f32
    %34 = vector.broadcast %cst_29 : f32 to vector<256x40xf32>
    %35 = arith.maximumf %33, %34 : vector<256x40xf32>
    %c0_30 = arith.constant 0 : index
    %c0_31 = arith.constant 0 : index
    %36 = vector.load %arg12[%c0_30, %c0_31] : memref<40x57xf32, #tpu.memory_space<vmem>>, vector<40x57xf32>
    %cst_32 = arith.constant dense<0.000000e+00> : vector<256x57xf32>
    %37 = tpu.matmul %35, %36, %cst_32 {dimension_numbers = #tpu.dot_dimension_numbers<[1], [0], [0], [1], [0, 0, 1, 1], [], []>} : vector<256x40xf32>, vector<40x57xf32>, vector<256x57xf32> -> vector<256x57xf32>
    %c0_33 = arith.constant 0 : index
    %c0_34 = arith.constant 0 : index
    %38 = vector.load %arg13[%c0_33, %c0_34] : memref<1x57xf32, #tpu.memory_space<vmem>>, vector<1x57xf32>
    %39 = vector.broadcast %38 : vector<1x57xf32> to vector<256x57xf32>
    %40 = arith.addf %37, %39 : vector<256x57xf32>
    %41 = arith.negf %40 : vector<256x57xf32>
    %42 = math.exp %41 : vector<256x57xf32>
    %cst_35 = arith.constant 1.000000e+00 : f32
    %43 = vector.broadcast %cst_35 : f32 to vector<256x57xf32>
    %44 = arith.addf %43, %42 : vector<256x57xf32>
    %45 = arith.divf %43, %44 : vector<256x57xf32>
    %c0_36 = arith.constant 0 : index
    %c0_37 = arith.constant 0 : index
    %46 = vector.load %arg14[%c0_36, %c0_37] : memref<256x57xf32, #tpu.memory_space<vmem>>, vector<256x57xf32>
    tpu.vector_store %arg14[%c0_36, %c0_37], %45 {strides = array<i32>} : memref<256x57xf32, #tpu.memory_space<vmem>>, vector<256x57xf32>,
    return
  }
  func.func @transform_0(%arg0: i32) -> (i32, i32) {
    %c0_i32 = arith.constant 0 : i32
    %c0_i32_0 = arith.constant 0 : i32
    return %arg0, %c0_i32 : i32, i32
  }
  func.func @transform_1(%arg0: i32) -> (i32, i32) {
    %c0_i32 = arith.constant 0 : i32
    %c0_i32_0 = arith.constant 0 : i32
    %c0_i32_1 = arith.constant 0 : i32
    return %c0_i32, %c0_i32_0 : i32, i32
  }
  func.func @transform_2(%arg0: i32) -> (i32, i32) {
    %c0_i32 = arith.constant 0 : i32
    %c0_i32_0 = arith.constant 0 : i32
    %c0_i32_1 = arith.constant 0 : i32
    return %c0_i32, %c0_i32_0 : i32, i32
  }
  func.func @transform_3(%arg0: i32) -> (i32, i32) {
    %c0_i32 = arith.constant 0 : i32
    %c0_i32_0 = arith.constant 0 : i32
    %c0_i32_1 = arith.constant 0 : i32
    return %c0_i32, %c0_i32_0 : i32, i32
  }
  func.func @transform_4(%arg0: i32) -> (i32, i32) {
    %c0_i32 = arith.constant 0 : i32
    %c0_i32_0 = arith.constant 0 : i32
    %c0_i32_1 = arith.constant 0 : i32
    return %c0_i32, %c0_i32_0 : i32, i32
  }
  func.func @transform_5(%arg0: i32) -> (i32, i32) {
    %c0_i32 = arith.constant 0 : i32
    %c0_i32_0 = arith.constant 0 : i32
    %c0_i32_1 = arith.constant 0 : i32
    return %c0_i32, %c0_i32_0 : i32, i32
  }
  func.func @transform_6(%arg0: i32) -> (i32, i32) {
    %c0_i32 = arith.constant 0 : i32
    %c0_i32_0 = arith.constant 0 : i32
    %c0_i32_1 = arith.constant 0 : i32
    return %c0_i32, %c0_i32_0 : i32, i32
  }
  func.func @transform_7(%arg0: i32) -> (i32, i32) {
    %c0_i32 = arith.constant 0 : i32
    %c0_i32_0 = arith.constant 0 : i32
    %c0_i32_1 = arith.constant 0 : i32
    return %c0_i32, %c0_i32_0 : i32, i32
  }
  func.func @transform_8(%arg0: i32) -> (i32, i32) {
    %c0_i32 = arith.constant 0 : i32
    %c0_i32_0 = arith.constant 0 : i32
    %c0_i32_1 = arith.constant 0 : i32
    return %c0_i32, %c0_i32_0 : i32, i32
  }
  func.func @transform_9(%arg0: i32) -> (i32, i32) {
    %c0_i32 = arith.constant 0 : i32
    %c0_i32_0 = arith.constant 0 : i32
    %c0_i32_1 = arith.constant 0 : i32
    return %c0_i32, %c0_i32_0 : i32, i32
  }
  func.func @transform_10(%arg0: i32) -> (i32, i32) {
    %c0_i32 = arith.constant 0 : i32
    %c0_i32_0 = arith.constant 0 : i32
    %c0_i32_1 = arith.constant 0 : i32
    return %c0_i32, %c0_i32_0 : i32, i32
  }
  func.func @transform_11(%arg0: i32) -> (i32, i32) {
    %c0_i32 = arith.constant 0 : i32
    %c0_i32_0 = arith.constant 0 : i32
    %c0_i32_1 = arith.constant 0 : i32
    return %c0_i32, %c0_i32_0 : i32, i32
  }
  func.func @transform_12(%arg0: i32) -> (i32, i32) {
    %c0_i32 = arith.constant 0 : i32
    %c0_i32_0 = arith.constant 0 : i32
    %c0_i32_1 = arith.constant 0 : i32
    return %c0_i32, %c0_i32_0 : i32, i32
  }
  func.func @transform_13(%arg0: i32) -> (i32, i32) {
    %c0_i32 = arith.constant 0 : i32
    %c0_i32_0 = arith.constant 0 : i32
    return %arg0, %c0_i32 : i32, i32
  }
}

</mosaic_0001>

<llo_original>
// kernel: tpu_custom_call.1
$region0: #{tpu_custom_call.1}
  #allocation0 [shape = 'u32[]', space=smem, size = 0x4, offset = 0x4, fixed_abs, tag = 'smem constant byte address 0x4 - core index']
  #allocation1 [shape = 'u32[72,128]{1,0:T(1,128)}', space=vmem, size = 0x9000, scoped, tag = 'internal scratch']
  %s0 = inlined_call_operand.vmem [shape: f32[300,57], index: 0, kind: input, shape index: {}]
  %s1 = inlined_call_operand.vmem [shape: f32[57,40], index: 1, kind: input, shape index: {}]
  %s2 = inlined_call_operand.vmem [shape: f32[1,40], index: 2, kind: input, shape index: {}]
  %s3 = inlined_call_operand.vmem [shape: f32[40,20], index: 3, kind: input, shape index: {}]
  %s4 = inlined_call_operand.vmem [shape: f32[1,20], index: 4, kind: input, shape index: {}]
  %s5 = inlined_call_operand.vmem [shape: f32[20,11], index: 5, kind: input, shape index: {}]
  %s6 = inlined_call_operand.vmem [shape: f32[1,11], index: 6, kind: input, shape index: {}]
  %s7 = inlined_call_operand.vmem [shape: f32[11,20], index: 7, kind: input, shape index: {}]
  %s8 = inlined_call_operand.vmem [shape: f32[1,20], index: 8, kind: input, shape index: {}]
  %s9 = inlined_call_operand.vmem [shape: f32[20,40], index: 9, kind: input, shape index: {}]
  %s10 = inlined_call_operand.vmem [shape: f32[1,40], index: 10, kind: input, shape index: {}]
  %s11 = inlined_call_operand.vmem [shape: f32[40,57], index: 11, kind: input, shape index: {}]
  %s12 = inlined_call_operand.vmem [shape: f32[1,57], index: 12, kind: input, shape index: {}]
  %s13 = inlined_call_operand.vmem [shape: f32[300,57], index: 13, kind: output, shape index: {}]
  %s14 = sld [smem:[#allocation0]]
  $region133: #{tpu_custom_call.1} parent=0
    _
  %s16 = ssub.s32 1, %s14
  %s17 = scalar_select 0, %s16, %s14
  $region1: #{tpu_custom_call.1} parent=0
    #allocation2 [shape = 'u8[262144]{0}', space=vmem, size = 0x40000, scoped, tag = 'output window, operand 0']
    loop: start=0, step=1, limit=4
    $region2: #{tpu_custom_call.1} parent=1 // loop_pre_header
      _
    $region3: #{tpu_custom_call.1} parent=1 // loop_header
      %s19 = sphi 0, %s23
      %p20 = scmp.ge.s32.totalorder %s19, 4
      %s29 = sphi 0, %s31
      %s32 = sphi 0, %s29
      %s33 = sphi 0, %s32
      %s49 = sphi 0, %s33
      %s53 = sphi 0, %s53
      %s55 = sphi 0, %s53
      %s56 = sphi 0, %s55
      %s70 = sphi 0, %s56
      %s74 = sphi 0, %s74
      %s76 = sphi 0, %s74
      %s77 = sphi 0, %s76
      %s91 = sphi 0, %s77
      %s95 = sphi 0, %s95
      %s97 = sphi 0, %s95
      %s98 = sphi 0, %s97
      %s112 = sphi 0, %s98
      %s116 = sphi 0, %s116
      %s118 = sphi 0, %s116
      %s119 = sphi 0, %s118
      %s133 = sphi 0, %s119
      %s137 = sphi 0, %s137
      %s139 = sphi 0, %s137
      %s140 = sphi 0, %s139
      %s154 = sphi 0, %s140
      %s158 = sphi 0, %s158
      %s160 = sphi 0, %s158
      %s161 = sphi 0, %s160
      %s175 = sphi 0, %s161
      %s179 = sphi 0, %s179
      %s181 = sphi 0, %s179
      %s182 = sphi 0, %s181
      %s196 = sphi 0, %s182
      %s200 = sphi 0, %s200
      %s202 = sphi 0, %s200
      %s203 = sphi 0, %s202
      %s217 = sphi 0, %s203
      %s221 = sphi 0, %s221
      %s223 = sphi 0, %s221
      %s224 = sphi 0, %s223
      %s238 = sphi 0, %s224
      %s242 = sphi 0, %s242
      %s244 = sphi 0, %s242
      %s245 = sphi 0, %s244
      %s259 = sphi 0, %s245
      %s263 = sphi 0, %s263
      %s265 = sphi 0, %s263
      %s266 = sphi 0, %s265
      %s280 = sphi 0, %s266
      %s284 = sphi 0, %s284
      %s286 = sphi 0, %s284
      %s287 = sphi 0, %s286
      %s301 = sphi 0, %s287
      %s307 = sphi 0, %s309
      %s310 = sphi 0, %s307
      %s311 = sphi 0, %s310
      %s327 = sphi 0, %s311
    $region4: #{tpu_custom_call.1} parent=1 // loop_header_branch
      %22 = sbr.rel (%p20) target = $region8
    $region5: #{tpu_custom_call.1} parent=1 // loop_body
      %s24 = ssub.s32 %s19, 1
      %s25 = ssub.s32 %s19, 2
      %s26 = sadd.s32 %s19, 1
      %s27 = ssub.s32 %s19, %s26
      %p28 = scmp.eq.s32.totalorder %s27, 0
      %s30 = sadd.s32 %s29, 1
      %s31 = scalar_select %p28, %s29, %s30
      %p34 = pneg %p28
      %p35 = scmp.eq.s32.totalorder %s19, 1
      %p36 = por %p34, %p35
      %p37 = scmp.ne.s32.totalorder %s29, %s32
      %p38 = scmp.eq.s32.totalorder %s19, 0
      %p39 = por %p37, %p38
      %p40 = scmp.ne.s32.totalorder %s29, %s32
      %p41 = scmp.eq.s32.totalorder %s24, 1
      %p42 = por %p40, %p41
      %p43 = scmp.ne.s32.totalorder %s32, %s33
      %p44 = scmp.eq.s32.totalorder %s24, 0
      %p45 = por %p43, %p44
      %p46 = scmp.ne.s32.totalorder %s32, %s33
      %p47 = scmp.eq.s32.totalorder %s25, 1
      %p48 = por %p46, %p47
      %p50 = scmp.ne.s32.totalorder %s33, %s49
      %p51 = scmp.eq.s32.totalorder %s25, 0
      %p52 = por %p50, %p51
      %s54 = sadd.s32 %s53, 1
      %p57 = scmp.eq.s32.totalorder %s19, 1
      %p58 = scmp.ne.s32.totalorder %s53, %s55
      %p59 = scmp.eq.s32.totalorder %s19, 0
      %p60 = por %p58, %p59
      %p61 = scmp.ne.s32.totalorder %s53, %s55
      %p62 = scmp.eq.s32.totalorder %s24, 1
      %p63 = por %p61, %p62
      %p64 = scmp.ne.s32.totalorder %s55, %s56
      %p65 = scmp.eq.s32.totalorder %s24, 0
      %p66 = por %p64, %p65
      %p67 = scmp.ne.s32.totalorder %s55, %s56
      %p68 = scmp.eq.s32.totalorder %s25, 1
      %p69 = por %p67, %p68
      %p71 = scmp.ne.s32.totalorder %s56, %s70
      %p72 = scmp.eq.s32.totalorder %s25, 0
      %p73 = por %p71, %p72
      %s75 = sadd.s32 %s74, 1
      %p78 = scmp.eq.s32.totalorder %s19, 1
      %p79 = scmp.ne.s32.totalorder %s74, %s76
      %p80 = scmp.eq.s32.totalorder %s19, 0
      %p81 = por %p79, %p80
      %p82 = scmp.ne.s32.totalorder %s74, %s76
      %p83 = scmp.eq.s32.totalorder %s24, 1
      %p84 = por %p82, %p83
      %p85 = scmp.ne.s32.totalorder %s76, %s77
      %p86 = scmp.eq.s32.totalorder %s24, 0
      %p87 = por %p85, %p86
      %p88 = scmp.ne.s32.totalorder %s76, %s77
      %p89 = scmp.eq.s32.totalorder %s25, 1
      %p90 = por %p88, %p89
      %p92 = scmp.ne.s32.totalorder %s77, %s91
      %p93 = scmp.eq.s32.totalorder %s25, 0
      %p94 = por %p92, %p93
      %s96 = sadd.s32 %s95, 1
      %p99 = scmp.eq.s32.totalorder %s19, 1
      %p100 = scmp.ne.s32.totalorder %s95, %s97
      %p101 = scmp.eq.s32.totalorder %s19, 0
      %p102 = por %p100, %p101
      %p103 = scmp.ne.s32.totalorder %s95, %s97
      %p104 = scmp.eq.s32.totalorder %s24, 1
      %p105 = por %p103, %p104
      %p106 = scmp.ne.s32.totalorder %s97, %s98
      %p107 = scmp.eq.s32.totalorder %s24, 0
      %p108 = por %p106, %p107
      %p109 = scmp.ne.s32.totalorder %s97, %s98
      %p110 = scmp.eq.s32.totalorder %s25, 1
      %p111 = por %p109, %p110
      %p113 = scmp.ne.s32.totalorder %s98, %s112
      %p114 = scmp.eq.s32.totalorder %s25, 0
      %p115 = por %p113, %p114
      %s117 = sadd.s32 %s116, 1
      %p120 = scmp.eq.s32.totalorder %s19, 1
      %p121 = scmp.ne.s32.totalorder %s116, %s118
      %p122 = scmp.eq.s32.totalorder %s19, 0
      %p123 = por %p121, %p122
      %p124 = scmp.ne.s32.totalorder %s116, %s118
      %p125 = scmp.eq.s32.totalorder %s24, 1
      %p126 = por %p124, %p125
      %p127 = scmp.ne.s32.totalorder %s118, %s119
      %p128 = scmp.eq.s32.totalorder %s24, 0
      %p129 = por %p127, %p128
      %p130 = scmp.ne.s32.totalorder %s118, %s119
      %p131 = scmp.eq.s32.totalorder %s25, 1
      %p132 = por %p130, %p131
      %p134 = scmp.ne.s32.totalorder %s119, %s133
      %p135 = scmp.eq.s32.totalorder %s25, 0
      %p136 = por %p134, %p135
      %s138 = sadd.s32 %s137, 1
      %p141 = scmp.eq.s32.totalorder %s19, 1
      %p142 = scmp.ne.s32.totalorder %s137, %s139
      %p143 = scmp.eq.s32.totalorder %s19, 0
      %p144 = por %p142, %p143
      %p145 = scmp.ne.s32.totalorder %s137, %s139
      %p146 = scmp.eq.s32.totalorder %s24, 1
      %p147 = por %p145, %p146
      %p148 = scmp.ne.s32.totalorder %s139, %s140
      %p149 = scmp.eq.s32.totalorder %s24, 0
      %p150 = por %p148, %p149
      %p151 = scmp.ne.s32.totalorder %s139, %s140
      %p152 = scmp.eq.s32.totalorder %s25, 1
      %p153 = por %p151, %p152
      %p155 = scmp.ne.s32.totalorder %s140, %s154
      %p156 = scmp.eq.s32.totalorder %s25, 0
      %p157 = por %p155, %p156
      %s159 = sadd.s32 %s158, 1
      %p162 = scmp.eq.s32.totalorder %s19, 1
      %p163 = scmp.ne.s32.totalorder %s158, %s160
      %p164 = scmp.eq.s32.totalorder %s19, 0
      %p165 = por %p163, %p164
      %p166 = scmp.ne.s32.totalorder %s158, %s160
      %p167 = scmp.eq.s32.totalorder %s24, 1
      %p168 = por %p166, %p167
      %p169 = scmp.ne.s32.totalorder %s160, %s161
      %p170 = scmp.eq.s32.totalorder %s24, 0
      %p171 = por %p169, %p170
      %p172 = scmp.ne.s32.totalorder %s160, %s161
      %p173 = scmp.eq.s32.totalorder %s25, 1
      %p174 = por %p172, %p173
      %p176 = scmp.ne.s32.totalorder %s161, %s175
      %p177 = scmp.eq.s32.totalorder %s25, 0
      %p178 = por %p176, %p177
      %s180 = sadd.s32 %s179, 1
      %p183 = scmp.eq.s32.totalorder %s19, 1
      %p184 = scmp.ne.s32.totalorder %s179, %s181
      %p185 = scmp.eq.s32.totalorder %s19, 0
      %p186 = por %p184, %p185
      %p187 = scmp.ne.s32.totalorder %s179, %s181
      %p188 = scmp.eq.s32.totalorder %s24, 1
      %p189 = por %p187, %p188
      %p190 = scmp.ne.s32.totalorder %s181, %s182
      %p191 = scmp.eq.s32.totalorder %s24, 0
      %p192 = por %p190, %p191
      %p193 = scmp.ne.s32.totalorder %s181, %s182
      %p194 = scmp.eq.s32.totalorder %s25, 1
      %p195 = por %p193, %p194
      %p197 = scmp.ne.s32.totalorder %s182, %s196
      %p198 = scmp.eq.s32.totalorder %s25, 0
      %p199 = por %p197, %p198
      %s201 = sadd.s32 %s200, 1
      %p204 = scmp.eq.s32.totalorder %s19, 1
      %p205 = scmp.ne.s32.totalorder %s200, %s202
      %p206 = scmp.eq.s32.totalorder %s19, 0
      %p207 = por %p205, %p206
      %p208 = scmp.ne.s32.totalorder %s200, %s202
      %p209 = scmp.eq.s32.totalorder %s24, 1
      %p210 = por %p208, %p209
      %p211 = scmp.ne.s32.totalorder %s202, %s203
      %p212 = scmp.eq.s32.totalorder %s24, 0
      %p213 = por %p211, %p212
      %p214 = scmp.ne.s32.totalorder %s202, %s203
      %p215 = scmp.eq.s32.totalorder %s25, 1
      %p216 = por %p214, %p215
      %p218 = scmp.ne.s32.totalorder %s203, %s217
      %p219 = scmp.eq.s32.totalorder %s25, 0
      %p220 = por %p218, %p219
      %s222 = sadd.s32 %s221, 1
      %p225 = scmp.eq.s32.totalorder %s19, 1
      %p226 = scmp.ne.s32.totalorder %s221, %s223
      %p227 = scmp.eq.s32.totalorder %s19, 0
      %p228 = por %p226, %p227
      %p229 = scmp.ne.s32.totalorder %s221, %s223
      %p230 = scmp.eq.s32.totalorder %s24, 1
      %p231 = por %p229, %p230
      %p232 = scmp.ne.s32.totalorder %s223, %s224
      %p233 = scmp.eq.s32.totalorder %s24, 0
      %p234 = por %p232, %p233
      %p235 = scmp.ne.s32.totalorder %s223, %s224
      %p236 = scmp.eq.s32.totalorder %s25, 1
      %p237 = por %p235, %p236
      %p239 = scmp.ne.s32.totalorder %s224, %s238
      %p240 = scmp.eq.s32.totalorder %s25, 0
      %p241 = por %p239, %p240
      %s243 = sadd.s32 %s242, 1
      %p246 = scmp.eq.s32.totalorder %s19, 1
      %p247 = scmp.ne.s32.totalorder %s242, %s244
      %p248 = scmp.eq.s32.totalorder %s19, 0
      %p249 = por %p247, %p248
      %p250 = scmp.ne.s32.totalorder %s242, %s244
      %p251 = scmp.eq.s32.totalorder %s24, 1
      %p252 = por %p250, %p251
      %p253 = scmp.ne.s32.totalorder %s244, %s245
      %p254 = scmp.eq.s32.totalorder %s24, 0
      %p255 = por %p253, %p254
      %p256 = scmp.ne.s32.totalorder %s244, %s245
      %p257 = scmp.eq.s32.totalorder %s25, 1
      %p258 = por %p256, %p257
      %p260 = scmp.ne.s32.totalorder %s245, %s259
      %p261 = scmp.eq.s32.totalorder %s25, 0
      %p262 = por %p260, %p261
      %s264 = sadd.s32 %s263, 1
      %p267 = scmp.eq.s32.totalorder %s19, 1
      %p268 = scmp.ne.s32.totalorder %s263, %s265
      %p269 = scmp.eq.s32.totalorder %s19, 0
      %p270 = por %p268, %p269
      %p271 = scmp.ne.s32.totalorder %s263, %s265
      %p272 = scmp.eq.s32.totalorder %s24, 1
      %p273 = por %p271, %p272
      %p274 = scmp.ne.s32.totalorder %s265, %s266
      %p275 = scmp.eq.s32.totalorder %s24, 0
      %p276 = por %p274, %p275
      %p277 = scmp.ne.s32.totalorder %s265, %s266
      %p278 = scmp.eq.s32.totalorder %s25, 1
      %p279 = por %p277, %p278
      %p281 = scmp.ne.s32.totalorder %s266, %s280
      %p282 = scmp.eq.s32.totalorder %s25, 0
      %p283 = por %p281, %p282
      %s285 = sadd.s32 %s284, 1
      %p288 = scmp.eq.s32.totalorder %s19, 1
      %p289 = scmp.ne.s32.totalorder %s284, %s286
      %p290 = scmp.eq.s32.totalorder %s19, 0
      %p291 = por %p289, %p290
      %p292 = scmp.ne.s32.totalorder %s284, %s286
      %p293 = scmp.eq.s32.totalorder %s24, 1
      %p294 = por %p292, %p293
      %p295 = scmp.ne.s32.totalorder %s286, %s287
      %p296 = scmp.eq.s32.totalorder %s24, 0
      %p297 = por %p295, %p296
      %p298 = scmp.ne.s32.totalorder %s286, %s287
      %p299 = scmp.eq.s32.totalorder %s25, 1
      %p300 = por %p298, %p299
      %p302 = scmp.ne.s32.totalorder %s287, %s301
      %p303 = scmp.eq.s32.totalorder %s25, 0
      %p304 = por %p302, %p303
      %s305 = ssub.s32 %s19, %s26
      %p306 = scmp.eq.s32.totalorder %s305, 0
      %s308 = sadd.s32 %s307, 1
      %s309 = scalar_select %p306, %s307, %s308
      %p312 = pneg %p306
      %p313 = scmp.eq.s32.totalorder %s19, 1
      %p314 = por %p312, %p313
      %p315 = scmp.ne.s32.totalorder %s307, %s310
      %p316 = scmp.eq.s32.totalorder %s19, 0
      %p317 = por %p315, %p316
      %p318 = scmp.ne.s32.totalorder %s307, %s310
      %p319 = scmp.eq.s32.totalorder %s24, 1
      %p320 = por %p318, %p319
      %p321 = scmp.ne.s32.totalorder %s310, %s311
      %p322 = scmp.eq.s32.totalorder %s24, 0
      %p323 = por %p321, %p322
      %p324 = scmp.ne.s32.totalorder %s310, %s311
      %p325 = scmp.eq.s32.totalorder %s25, 1
      %p326 = por %p324, %p325
      %p328 = scmp.ne.s32.totalorder %s311, %s327
      %p329 = scmp.eq.s32.totalorder %s25, 0
      %p330 = por %p328, %p329
      %p331 = scmp.le.s32.totalorder 1, %s19
      %p332 = scmp.lt.s32.totalorder %s19, 3
      %p333 = pnand %p331, %p332
      %p334 = pneg %p333
      // Predicated region
      $region9: #{tpu_custom_call.1} parent=5 // pred_check
        _
      $region10: #{tpu_custom_call.1} parent=5 // pred_check_branch
        %336 = sbr.rel (%p333) target = $region12
      $region11: #{tpu_custom_call.1} parent=5 // pred_region
        %s337 = ssub.s32 %s19, 1
        // Predicated region
        $region13: #{tpu_custom_call.1} parent=11 // pred_check
          %p338 = pneg %p66
        $region14: #{tpu_custom_call.1} parent=11 // pred_check_branch
          %340 = sbr.rel (%p338) target = $region16
        $region15: #{tpu_custom_call.1} parent=11 // pred_region
          _
        $region16: #{tpu_custom_call.1} parent=11 // pred_fallthru
          _
        // Predicated region
        $region17: #{tpu_custom_call.1} parent=11 // pred_check
          %p341 = pneg %p87
        $region18: #{tpu_custom_call.1} parent=11 // pred_check_branch
          %343 = sbr.rel (%p341) target = $region20
        $region19: #{tpu_custom_call.1} parent=11 // pred_region
          _
        $region20: #{tpu_custom_call.1} parent=11 // pred_fallthru
          _
        // Predicated region
        $region21: #{tpu_custom_call.1} parent=11 // pred_check
          %p344 = pneg %p108
        $region22: #{tpu_custom_call.1} parent=11 // pred_check_branch
          %346 = sbr.rel (%p344) target = $region24
        $region23: #{tpu_custom_call.1} parent=11 // pred_region
          _
        $region24: #{tpu_custom_call.1} parent=11 // pred_fallthru
          _
        // Predicated region
        $region25: #{tpu_custom_call.1} parent=11 // pred_check
          %p347 = pneg %p129
        $region26: #{tpu_custom_call.1} parent=11 // pred_check_branch
          %349 = sbr.rel (%p347) target = $region28
        $region27: #{tpu_custom_call.1} parent=11 // pred_region
          _
        $region28: #{tpu_custom_call.1} parent=11 // pred_fallthru
          _
        // Predicated region
        $region29: #{tpu_custom_call.1} parent=11 // pred_check
          %p350 = pneg %p150
        $region30: #{tpu_custom_call.1} parent=11 // pred_check_branch
          %352 = sbr.rel (%p350) target = $region32
        $region31: #{tpu_custom_call.1} parent=11 // pred_region
          _
        $region32: #{tpu_custom_call.1} parent=11 // pred_fallthru
          _
        // Predicated region
        $region33: #{tpu_custom_call.1} parent=11 // pred_check
          %p353 = pneg %p171
        $region34: #{tpu_custom_call.1} parent=11 // pred_check_branch
          %355 = sbr.rel (%p353) target = $region36
        $region35: #{tpu_custom_call.1} parent=11 // pred_region
          _
        $region36: #{tpu_custom_call.1} parent=11 // pred_fallthru
          _
        // Predicated region
        $region37: #{tpu_custom_call.1} parent=11 // pred_check
          %p356 = pneg %p192
        $region38: #{tpu_custom_call.1} parent=11 // pred_check_branch
          %358 = sbr.rel (%p356) target = $region40
        $region39: #{tpu_custom_call.1} parent=11 // pred_region
          _
        $region40: #{tpu_custom_call.1} parent=11 // pred_fallthru
          _
        // Predicated region
        $region41: #{tpu_custom_call.1} parent=11 // pred_check
          %p359 = pneg %p213
        $region42: #{tpu_custom_call.1} parent=11 // pred_check_branch
          %361 = sbr.rel (%p359) target = $region44
        $region43: #{tpu_custom_call.1} parent=11 // pred_region
          _
        $region44: #{tpu_custom_call.1} parent=11 // pred_fallthru
          _
        // Predicated region
        $region45: #{tpu_custom_call.1} parent=11 // pred_check
          %p362 = pneg %p234
        $region46: #{tpu_custom_call.1} parent=11 // pred_check_branch
          %364 = sbr.rel (%p362) target = $region48
        $region47: #{tpu_custom_call.1} parent=11 // pred_region
          _
        $region48: #{tpu_custom_call.1} parent=11 // pred_fallthru
          _
        // Predicated region
        $region49: #{tpu_custom_call.1} parent=11 // pred_check
          %p365 = pneg %p255
        $region50: #{tpu_custom_call.1} parent=11 // pred_check_branch
          %367 = sbr.rel (%p365) target = $region52
        $region51: #{tpu_custom_call.1} parent=11 // pred_region
          _
        $region52: #{tpu_custom_call.1} parent=11 // pred_fallthru
          _
        // Predicated region
        $region53: #{tpu_custom_call.1} parent=11 // pred_check
          %p368 = pneg %p276
        $region54: #{tpu_custom_call.1} parent=11 // pred_check_branch
          %370 = sbr.rel (%p368) target = $region56
        $region55: #{tpu_custom_call.1} parent=11 // pred_region
          _
        $region56: #{tpu_custom_call.1} parent=11 // pred_fallthru
          _
        // Predicated region
        $region57: #{tpu_custom_call.1} parent=11 // pred_check
          %p371 = pneg %p297
        $region58: #{tpu_custom_call.1} parent=11 // pred_check_branch
          %373 = sbr.rel (%p371) target = $region60
        $region59: #{tpu_custom_call.1} parent=11 // pred_region
          _
        $region60: #{tpu_custom_call.1} parent=11 // pred_fallthru
          _
      $region12: #{tpu_custom_call.1} parent=5 // pred_fallthru
        _
      %p374 = scmp.lt.s32.totalorder %s19, 2
      // Predicated region
      $region61: #{tpu_custom_call.1} parent=5 // pred_check
        %p375 = pneg %p374
      $region62: #{tpu_custom_call.1} parent=5 // pred_check_branch
        %377 = sbr.rel (%p375) target = $region64
      $region63: #{tpu_custom_call.1} parent=5 // pred_region
        // Predicated region
        $region65: #{tpu_custom_call.1} parent=63 // pred_check
          %p378 = pneg %p39
        $region66: #{tpu_custom_call.1} parent=63 // pred_check_branch
          %380 = sbr.rel (%p378) target = $region68
        $region67: #{tpu_custom_call.1} parent=63 // pred_region
          %s381 = smul.u32 32, %s19
          %s382 = ssub.s32 38, %s381
          %p383 = scmp.lt.s32.totalorder %s382, 32
          %s384 = scalar_select %p383, %s382, 32
          %s385 = smul.u32 8, %s384
          %p386 = scmp.lt.s32.totalorder %s381, 37
          %s387 = scalar_select %p386, %s381, 37
          %s388 = smul.addr %s387, 8
          %s389 = scalar_lea.vmem %s0, %s388
          %s390 = smul.u32 32, %s19
          %s391 = ssub.s32 38, %s390
          %p392 = scmp.lt.s32.totalorder %s391, 32
          %s393 = scalar_select %p392, %s391, 32
          %s394 = smul.u32 8, %s393
        $region68: #{tpu_custom_call.1} parent=63 // pred_fallthru
          _
      $region64: #{tpu_custom_call.1} parent=5 // pred_fallthru
        _
      %p395 = scmp.le.s32.totalorder 1, %s19
      %p396 = scmp.lt.s32.totalorder %s19, 3
      %p397 = pnand %p395, %p396
      %p398 = pneg %p397
      // Predicated region
      $region69: #{tpu_custom_call.1} parent=5 // pred_check
        _
      $region70: #{tpu_custom_call.1} parent=5 // pred_check_branch
        %400 = sbr.rel (%p397) target = $region72
      $region71: #{tpu_custom_call.1} parent=5 // pred_region
        %s401 = ssub.s32 %s19, 1
        %s402 = smul.u32 32, %s24
        %s403 = ssub.s32 38, %s402
        %p404 = scmp.lt.s32.totalorder %s403, 32
        %s405 = scalar_select %p404, %s403, 32
        %s406 = smul.u32 8, %s405
        %p407 = scmp.lt.s32.totalorder %s402, 37
        %s408 = scalar_select %p407, %s402, 37
        %s409 = smul.addr %s408, 8
        %s410 = scalar_lea.vmem %s0, %s409
        %p411 = pneg %p45
        %p412 = pneg %p42
        %p413 = pneg %p66
        %p414 = pneg %p63
        %p415 = pneg %p87
        %p416 = pneg %p84
        %p417 = pneg %p108
        %p418 = pneg %p105
        %p419 = pneg %p129
        %p420 = pneg %p126
        %p421 = pneg %p150
        %p422 = pneg %p147
        %p423 = pneg %p171
        %p424 = pneg %p168
        %p425 = pneg %p192
        %p426 = pneg %p189
        %p427 = pneg %p213
        %p428 = pneg %p210
        %p429 = pneg %p234
        %p430 = pneg %p231
        %p431 = pneg %p255
        %p432 = pneg %p252
        %p433 = pneg %p276
        %p434 = pneg %p273
        %p435 = pneg %p297
        %p436 = pneg %p294
        %p437 = pneg %p323
        %p438 = pneg %p320
        %s439 = sand.u32 %s310, 1
        %s440 = sand.u32 %s310, 1
        %s441 = smul.addr %s440, 256
        %s442 = scalar_lea.vmem [#allocation2], %s441
        %s443 = smul.u32 32, %s24
        %s444 = ssub.s32 38, %s443
        %p445 = scmp.lt.s32.totalorder %s444, 32
        %s446 = scalar_select %p445, %s444, 32
        %s447 = smul.u32 8, %s446
        %p448 = scmp.lt.s32.totalorder %s443, 37
        %s449 = scalar_select %p448, %s443, 37
        %s450 = smul.addr %s449, 8
        %s451 = scalar_lea.vmem %s0, %s450
        %s452 = smul.u32 32, %s24
        %s453 = ssub.s32 38, %s452
        %p454 = scmp.lt.s32.totalorder %s453, 32
        %s455 = scalar_select %p454, %s453, 32
        %s456 = smul.u32 8, %s455
        %s457 = smul.u32 32, %s24
        %s458 = ssub.s32 38, %s457
        %p459 = scmp.lt.s32.totalorder %s458, 32
        %s460 = scalar_select %p459, %s458, 32
        %s461 = smul.u32 8, %s460
        %v462 = vld [vmem:[%s451] sm:$0xff]
        %v463 = vld [vmem:[%s451 + $0x8] sm:$0xff]
        %v464 = vld [vmem:[%s451 + $0x10] sm:$0xff]
        %v465 = vld [vmem:[%s451 + $0x18] sm:$0xff]
        %v466 = vld [vmem:[%s451 + $0x20] sm:$0xff]
        %v467 = vld [vmem:[%s451 + $0x28] sm:$0xff]
        %v468 = vld [vmem:[%s451 + $0x30] sm:$0xff]
        %v469 = vld [vmem:[%s451 + $0x38] sm:$0xff]
        %v470 = vld [vmem:[%s451 + $0x40] sm:$0xff]
        %v471 = vld [vmem:[%s451 + $0x48] sm:$0xff]
        %v472 = vld [vmem:[%s451 + $0x50] sm:$0xff]
        %v473 = vld [vmem:[%s451 + $0x58] sm:$0xff]
        %v474 = vld [vmem:[%s451 + $0x60] sm:$0xff]
        %v475 = vld [vmem:[%s451 + $0x68] sm:$0xff]
        %v476 = vld [vmem:[%s451 + $0x70] sm:$0xff]
        %v477 = vld [vmem:[%s451 + $0x78] sm:$0xff]
        %v478 = vld [vmem:[%s451 + $0x80] sm:$0xff]
        %v479 = vld [vmem:[%s451 + $0x88] sm:$0xff]
        %v480 = vld [vmem:[%s451 + $0x90] sm:$0xff]
        %v481 = vld [vmem:[%s451 + $0x98] sm:$0xff]
        %v482 = vld [vmem:[%s451 + $0xa0] sm:$0xff]
        %v483 = vld [vmem:[%s451 + $0xa8] sm:$0xff]
        %v484 = vld [vmem:[%s451 + $0xb0] sm:$0xff]
        %v485 = vld [vmem:[%s451 + $0xb8] sm:$0xff]
        %v486 = vld [vmem:[%s451 + $0xc0] sm:$0xff]
        %v487 = vld [vmem:[%s451 + $0xc8] sm:$0xff]
        %v488 = vld [vmem:[%s451 + $0xd0] sm:$0xff]
        %v489 = vld [vmem:[%s451 + $0xd8] sm:$0xff]
        %v490 = vld [vmem:[%s451 + $0xe0] sm:$0xff]
        %v491 = vld [vmem:[%s451 + $0xe8] sm:$0xff]
        %v492 = vld [vmem:[%s451 + $0xf0] sm:$0xff]
        %v493 = vld [vmem:[%s451 + $0xf8] sm:$0xff]
        %v494 = vld [vmem:[%s1] sm:$0xff]
        %v495 = vld [vmem:[%s1 + $0x8] sm:$0xff]
        %v496 = vld [vmem:[%s1 + $0x10] sm:$0xff]
        %v497 = vld [vmem:[%s1 + $0x18] sm:$0xff]
        %v498 = vld [vmem:[%s1 + $0x20] sm:$0xff]
        %v499 = vld [vmem:[%s1 + $0x28] sm:$0xff]
        %v500 = vld [vmem:[%s1 + $0x30] sm:$0xff]
        %v501 = vld [vmem:[%s1 + $0x38] sm:$0x1]
        %v502 = vld [vmem:[%s2] sm:$0x1]
        %v504 = vperm.slane %v502, 0
        %vm506 = vcmask 465920
        %v508 = vsel %vm506, %v462, 0
        %v511 = vsel %vm506, %v463, 0
        %v514 = vsel %vm506, %v464, 0
        %v517 = vsel %vm506, %v465, 0
        %v520 = vsel %vm506, %v466, 0
        %v523 = vsel %vm506, %v467, 0
        %v526 = vsel %vm506, %v468, 0
        %v529 = vsel %vm506, %v469, 0
        %v532 = vsel %vm506, %v470, 0
        %v535 = vsel %vm506, %v471, 0
        %v538 = vsel %vm506, %v472, 0
        %v541 = vsel %vm506, %v473, 0
        %v544 = vsel %vm506, %v474, 0
        %v547 = vsel %vm506, %v475, 0
        %v550 = vsel %vm506, %v476, 0
        %v553 = vsel %vm506, %v477, 0
        %v556 = vsel %vm506, %v478, 0
        %v559 = vsel %vm506, %v479, 0
        %v562 = vsel %vm506, %v480, 0
        %v565 = vsel %vm506, %v481, 0
        %v568 = vsel %vm506, %v482, 0
        %v571 = vsel %vm506, %v483, 0
        %v574 = vsel %vm506, %v484, 0
        %v577 = vsel %vm506, %v485, 0
        %v580 = vsel %vm506, %v486, 0
        %v583 = vsel %vm506, %v487, 0
        %v586 = vsel %vm506, %v488, 0
        %v589 = vsel %vm506, %v489, 0
        %v592 = vsel %vm506, %v490, 0
        %v595 = vsel %vm506, %v491, 0
        %v598 = vsel %vm506, %v492, 0
        %v601 = vsel %vm506, %v493, 0
        %vm603 = vcmask 1040384
        %v605 = vsel %vm603, %v501, 0
        %607 = vmatpush.msra.mxu0 0.0
        %608 = vmatpush.msra.mxu0 0.0
        %609 = vmatpush.msra.mxu0 0.0
        %610 = vmatpush.msra.mxu0 0.0
        %611 = vmatpush.msra.mxu0 0.0
        %612 = vmatpush.msra.mxu0 0.0
        %613 = vmatpush.msra.mxu0 0.0
        %614 = vmatpush.msra.mxu0 0.0
        %615 = vmatpush.msra.mxu0 %v605
        %616 = vmatpush.msra.mxu0 %v500
        %617 = vmatpush.msra.mxu0 %v499
        %618 = vmatpush.msra.mxu0 %v498
        %619 = vmatpush.msra.mxu0 %v497
        %620 = vmatpush.msra.mxu0 %v496
        %621 = vmatpush.msra.mxu0 %v495
        %622 = vmatpush.msra.mxu0 %v494
        %623 = vmatmul.f32.gmra.mxu0 %v508
        %v624 = vpop.f32.mrf.mxu0
        %v625 = vadd.f32 %v504, %v624
        %626 = vmatmul.f32.gmra.mxu0 %v511
        %v627 = vpop.f32.mrf.mxu0
        %v628 = vadd.f32 %v504, %v627
        %629 = vmatmul.f32.gmra.mxu0 %v514
        %v630 = vpop.f32.mrf.mxu0
        %v631 = vadd.f32 %v504, %v630
        %632 = vmatmul.f32.gmra.mxu0 %v517
        %v633 = vpop.f32.mrf.mxu0
        %v634 = vadd.f32 %v504, %v633
        %635 = vmatmul.f32.gmra.mxu0 %v520
        %v636 = vpop.f32.mrf.mxu0
        %v637 = vadd.f32 %v504, %v636
        %638 = vmatmul.f32.gmra.mxu0 %v523
        %v639 = vpop.f32.mrf.mxu0
        %v640 = vadd.f32 %v504, %v639
        %641 = vmatmul.f32.gmra.mxu0 %v526
        %v642 = vpop.f32.mrf.mxu0
        %v643 = vadd.f32 %v504, %v642
        %644 = vmatmul.f32.gmra.mxu0 %v529
        %v645 = vpop.f32.mrf.mxu0
        %v646 = vadd.f32 %v504, %v645
        %647 = vmatmul.f32.gmra.mxu0 %v532
        %v648 = vpop.f32.mrf.mxu0
        %v649 = vadd.f32 %v504, %v648
        %650 = vmatmul.f32.gmra.mxu0 %v535
        %v651 = vpop.f32.mrf.mxu0
        %v652 = vadd.f32 %v504, %v651
        %653 = vmatmul.f32.gmra.mxu0 %v538
        %v654 = vpop.f32.mrf.mxu0
        %v655 = vadd.f32 %v504, %v654
        %656 = vmatmul.f32.gmra.mxu0 %v541
        %v657 = vpop.f32.mrf.mxu0
        %v658 = vadd.f32 %v504, %v657
        %659 = vmatmul.f32.gmra.mxu0 %v544
        %v660 = vpop.f32.mrf.mxu0
        %v661 = vadd.f32 %v504, %v660
        %662 = vmatmul.f32.gmra.mxu0 %v547
        %v663 = vpop.f32.mrf.mxu0
        %v664 = vadd.f32 %v504, %v663
        %665 = vmatmul.f32.gmra.mxu0 %v550
        %v666 = vpop.f32.mrf.mxu0
        %v667 = vadd.f32 %v504, %v666
        %668 = vmatmul.f32.gmra.mxu0 %v553
        %v669 = vpop.f32.mrf.mxu0
        %v670 = vadd.f32 %v504, %v669
        %671 = vmatmul.f32.gmra.mxu0 %v556
        %v672 = vpop.f32.mrf.mxu0
        %v673 = vadd.f32 %v504, %v672
        %674 = vmatmul.f32.gmra.mxu0 %v559
        %v675 = vpop.f32.mrf.mxu0
        %v676 = vadd.f32 %v504, %v675
        %677 = vmatmul.f32.gmra.mxu0 %v562
        %v678 = vpop.f32.mrf.mxu0
        %v679 = vadd.f32 %v504, %v678
        %680 = vmatmul.f32.gmra.mxu0 %v565
        %v681 = vpop.f32.mrf.mxu0
        %v682 = vadd.f32 %v504, %v681
        %683 = vmatmul.f32.gmra.mxu0 %v568
        %v684 = vpop.f32.mrf.mxu0
        %v685 = vadd.f32 %v504, %v684
        %686 = vmatmul.f32.gmra.mxu0 %v571
        %v687 = vpop.f32.mrf.mxu0
        %v688 = vadd.f32 %v504, %v687
        %689 = vmatmul.f32.gmra.mxu0 %v574
        %v690 = vpop.f32.mrf.mxu0
        %v691 = vadd.f32 %v504, %v690
        %692 = vmatmul.f32.gmra.mxu0 %v577
        %v693 = vpop.f32.mrf.mxu0
        %v694 = vadd.f32 %v504, %v693
        %695 = vmatmul.f32.gmra.mxu0 %v580
        %v696 = vpop.f32.mrf.mxu0
        %v697 = vadd.f32 %v504, %v696
        %698 = vmatmul.f32.gmra.mxu0 %v583
        %v699 = vpop.f32.mrf.mxu0
        %v700 = vadd.f32 %v504, %v699
        %701 = vmatmul.f32.gmra.mxu0 %v586
        %v702 = vpop.f32.mrf.mxu0
        %v703 = vadd.f32 %v504, %v702
        %704 = vmatmul.f32.gmra.mxu0 %v589
        %v705 = vpop.f32.mrf.mxu0
        %v706 = vadd.f32 %v504, %v705
        %707 = vmatmul.f32.gmra.mxu0 %v592
        %v708 = vpop.f32.mrf.mxu0
        %v709 = vadd.f32 %v504, %v708
        %710 = vmatmul.f32.gmra.mxu0 %v595
        %v711 = vpop.f32.mrf.mxu0
        %v712 = vadd.f32 %v504, %v711
        %713 = vmatmul.f32.gmra.mxu0 %v598
        %v714 = vpop.f32.mrf.mxu0
        %v715 = vadd.f32 %v504, %v714
        %716 = vmatmul.f32.gmra.mxu0 %v601
        %v717 = vpop.f32.mrf.mxu0
        %v718 = vadd.f32 %v504, %v717
        %719 = vdwg.mxu0
        %v720 = vmax.f32 %v625, 0.0
        %v721 = vmax.f32 %v628, 0.0
        %v722 = vmax.f32 %v631, 0.0
        %v723 = vmax.f32 %v634, 0.0
        %v724 = vmax.f32 %v637, 0.0
        %v725 = vmax.f32 %v640, 0.0
        %v726 = vmax.f32 %v643, 0.0
        %v727 = vmax.f32 %v646, 0.0
        %v728 = vmax.f32 %v649, 0.0
        %v729 = vmax.f32 %v652, 0.0
        %v730 = vmax.f32 %v655, 0.0
        %v731 = vmax.f32 %v658, 0.0
        %v732 = vmax.f32 %v661, 0.0
        %v733 = vmax.f32 %v664, 0.0
        %v734 = vmax.f32 %v667, 0.0
        %v735 = vmax.f32 %v670, 0.0
        %v736 = vmax.f32 %v673, 0.0
        %v737 = vmax.f32 %v676, 0.0
        %v738 = vmax.f32 %v679, 0.0
        %v739 = vmax.f32 %v682, 0.0
        %v740 = vmax.f32 %v685, 0.0
        %v741 = vmax.f32 %v688, 0.0
        %v742 = vmax.f32 %v691, 0.0
        %v743 = vmax.f32 %v694, 0.0
        %v744 = vmax.f32 %v697, 0.0
        %v745 = vmax.f32 %v700, 0.0
        %v746 = vmax.f32 %v703, 0.0
        %v747 = vmax.f32 %v706, 0.0
        %v748 = vmax.f32 %v709, 0.0
        %v749 = vmax.f32 %v712, 0.0
        %v750 = vmax.f32 %v715, 0.0
        %v751 = vmax.f32 %v718, 0.0
        %v752 = vld [vmem:[%s3] sm:$0xff]
        %v753 = vld [vmem:[%s3 + $0x8] sm:$0xff]
        %v754 = vld [vmem:[%s3 + $0x10] sm:$0xff]
        %v755 = vld [vmem:[%s3 + $0x18] sm:$0xff]
        %v756 = vld [vmem:[%s3 + $0x20] sm:$0xff]
        %v757 = vld [vmem:[%s4] sm:$0x1]
        %v759 = vperm.slane %v757, 0
        %vm761 = vcmask 326656
        %v763 = vsel %vm761, %v720, 0
        %v766 = vsel %vm761, %v721, 0
        %v769 = vsel %vm761, %v722, 0
        %v772 = vsel %vm761, %v723, 0
        %v775 = vsel %vm761, %v724, 0
        %v778 = vsel %vm761, %v725, 0
        %v781 = vsel %vm761, %v726, 0
        %v784 = vsel %vm761, %v727, 0
        %v787 = vsel %vm761, %v728, 0
        %v790 = vsel %vm761, %v729, 0
        %v793 = vsel %vm761, %v730, 0
        %v796 = vsel %vm761, %v731, 0
        %v799 = vsel %vm761, %v732, 0
        %v802 = vsel %vm761, %v733, 0
        %v805 = vsel %vm761, %v734, 0
        %v808 = vsel %vm761, %v735, 0
        %v811 = vsel %vm761, %v736, 0
        %v814 = vsel %vm761, %v737, 0
        %v817 = vsel %vm761, %v738, 0
        %v820 = vsel %vm761, %v739, 0
        %v823 = vsel %vm761, %v740, 0
        %v826 = vsel %vm761, %v741, 0
        %v829 = vsel %vm761, %v742, 0
        %v832 = vsel %vm761, %v743, 0
        %v835 = vsel %vm761, %v744, 0
        %v838 = vsel %vm761, %v745, 0
        %v841 = vsel %vm761, %v746, 0
        %v844 = vsel %vm761, %v747, 0
        %v847 = vsel %vm761, %v748, 0
        %v850 = vsel %vm761, %v749, 0
        %v853 = vsel %vm761, %v750, 0
        %v856 = vsel %vm761, %v751, 0
        %858 = vmatpush.msra.mxu0 0.0
        %859 = vmatpush.msra.mxu0 0.0
        %860 = vmatpush.msra.mxu0 0.0
        %861 = vmatpush.msra.mxu0 0.0
        %862 = vmatpush.msra.mxu0 0.0
        %863 = vmatpush.msra.mxu0 0.0
        %864 = vmatpush.msra.mxu0 0.0
        %865 = vmatpush.msra.mxu0 0.0
        %866 = vmatpush.msra.mxu0 0.0
        %867 = vmatpush.msra.mxu0 0.0
        %868 = vmatpush.msra.mxu0 0.0
        %869 = vmatpush.msra.mxu0 %v756
        %870 = vmatpush.msra.mxu0 %v755
        %871 = vmatpush.msra.mxu0 %v754
        %872 = vmatpush.msra.mxu0 %v753
        %873 = vmatpush.msra.mxu0 %v752
        %874 = vmatmul.f32.gmra.mxu0 %v763
        %v875 = vpop.f32.mrf.mxu0
        %v876 = vadd.f32 %v759, %v875
        %877 = vmatmul.f32.gmra.mxu0 %v766
        %v878 = vpop.f32.mrf.mxu0
        %v879 = vadd.f32 %v759, %v878
        %880 = vmatmul.f32.gmra.mxu0 %v769
        %v881 = vpop.f32.mrf.mxu0
        %v882 = vadd.f32 %v759, %v881
        %883 = vmatmul.f32.gmra.mxu0 %v772
        %v884 = vpop.f32.mrf.mxu0
        %v885 = vadd.f32 %v759, %v884
        %886 = vmatmul.f32.gmra.mxu0 %v775
        %v887 = vpop.f32.mrf.mxu0
        %v888 = vadd.f32 %v759, %v887
        %889 = vmatmul.f32.gmra.mxu0 %v778
        %v890 = vpop.f32.mrf.mxu0
        %v891 = vadd.f32 %v759, %v890
        %892 = vmatmul.f32.gmra.mxu0 %v781
        %v893 = vpop.f32.mrf.mxu0
        %v894 = vadd.f32 %v759, %v893
        %895 = vmatmul.f32.gmra.mxu0 %v784
        %v896 = vpop.f32.mrf.mxu0
        %v897 = vadd.f32 %v759, %v896
        %898 = vmatmul.f32.gmra.mxu0 %v787
        %v899 = vpop.f32.mrf.mxu0
        %v900 = vadd.f32 %v759, %v899
        %901 = vmatmul.f32.gmra.mxu0 %v790
        %v902 = vpop.f32.mrf.mxu0
        %v903 = vadd.f32 %v759, %v902
        %904 = vmatmul.f32.gmra.mxu0 %v793
        %v905 = vpop.f32.mrf.mxu0
        %v906 = vadd.f32 %v759, %v905
        %907 = vmatmul.f32.gmra.mxu0 %v796
        %v908 = vpop.f32.mrf.mxu0
        %v909 = vadd.f32 %v759, %v908
        %910 = vmatmul.f32.gmra.mxu0 %v799
        %v911 = vpop.f32.mrf.mxu0
        %v912 = vadd.f32 %v759, %v911
        %913 = vmatmul.f32.gmra.mxu0 %v802
        %v914 = vpop.f32.mrf.mxu0
        %v915 = vadd.f32 %v759, %v914
        %916 = vmatmul.f32.gmra.mxu0 %v805
        %v917 = vpop.f32.mrf.mxu0
        %v918 = vadd.f32 %v759, %v917
        %919 = vmatmul.f32.gmra.mxu0 %v808
        %v920 = vpop.f32.mrf.mxu0
        %v921 = vadd.f32 %v759, %v920
        %922 = vmatmul.f32.gmra.mxu0 %v811
        %v923 = vpop.f32.mrf.mxu0
        %v924 = vadd.f32 %v759, %v923
        %925 = vmatmul.f32.gmra.mxu0 %v814
        %v926 = vpop.f32.mrf.mxu0
        %v927 = vadd.f32 %v759, %v926
        %928 = vmatmul.f32.gmra.mxu0 %v817
        %v929 = vpop.f32.mrf.mxu0
        %v930 = vadd.f32 %v759, %v929
        %931 = vmatmul.f32.gmra.mxu0 %v820
        %v932 = vpop.f32.mrf.mxu0
        %v933 = vadd.f32 %v759, %v932
        %934 = vmatmul.f32.gmra.mxu0 %v823
        %v935 = vpop.f32.mrf.mxu0
        %v936 = vadd.f32 %v759, %v935
        %937 = vmatmul.f32.gmra.mxu0 %v826
        %v938 = vpop.f32.mrf.mxu0
        %v939 = vadd.f32 %v759, %v938
        %940 = vmatmul.f32.gmra.mxu0 %v829
        %v941 = vpop.f32.mrf.mxu0
        %v942 = vadd.f32 %v759, %v941
        %943 = vmatmul.f32.gmra.mxu0 %v832
        %v944 = vpop.f32.mrf.mxu0
        %v945 = vadd.f32 %v759, %v944
        %946 = vmatmul.f32.gmra.mxu0 %v835
        %v947 = vpop.f32.mrf.mxu0
        %v948 = vadd.f32 %v759, %v947
        %949 = vmatmul.f32.gmra.mxu0 %v838
        %v950 = vpop.f32.mrf.mxu0
        %v951 = vadd.f32 %v759, %v950
        %952 = vmatmul.f32.gmra.mxu0 %v841
        %v953 = vpop.f32.mrf.mxu0
        %v954 = vadd.f32 %v759, %v953
        %955 = vmatmul.f32.gmra.mxu0 %v844
        %v956 = vpop.f32.mrf.mxu0
        %v957 = vadd.f32 %v759, %v956
        %958 = vmatmul.f32.gmra.mxu0 %v847
        %v959 = vpop.f32.mrf.mxu0
        %v960 = vadd.f32 %v759, %v959
        %961 = vmatmul.f32.gmra.mxu0 %v850
        %v962 = vpop.f32.mrf.mxu0
        %v963 = vadd.f32 %v759, %v962
        %964 = vmatmul.f32.gmra.mxu0 %v853
        %v965 = vpop.f32.mrf.mxu0
        %v966 = vadd.f32 %v759, %v965
        %967 = vmatmul.f32.gmra.mxu0 %v856
        %v968 = vpop.f32.mrf.mxu0
        %v969 = vadd.f32 %v759, %v968
        %970 = vdwg.mxu0
        %v971 = vmax.f32 %v876, 0.0
        %v972 = vmax.f32 %v879, 0.0
        %v973 = vmax.f32 %v882, 0.0
        %v974 = vmax.f32 %v885, 0.0
        %v975 = vmax.f32 %v888, 0.0
        %v976 = vmax.f32 %v891, 0.0
        %v977 = vmax.f32 %v894, 0.0
        %v978 = vmax.f32 %v897, 0.0
        %v979 = vmax.f32 %v900, 0.0
        %v980 = vmax.f32 %v903, 0.0
        %v981 = vmax.f32 %v906, 0.0
        %v982 = vmax.f32 %v909, 0.0
        %v983 = vmax.f32 %v912, 0.0
        %v984 = vmax.f32 %v915, 0.0
        %v985 = vmax.f32 %v918, 0.0
        %v986 = vmax.f32 %v921, 0.0
        %v987 = vmax.f32 %v924, 0.0
        %v988 = vmax.f32 %v927, 0.0
        %v989 = vmax.f32 %v930, 0.0
        %v990 = vmax.f32 %v933, 0.0
        %v991 = vmax.f32 %v936, 0.0
        %v992 = vmax.f32 %v939, 0.0
        %v993 = vmax.f32 %v942, 0.0
        %v994 = vmax.f32 %v945, 0.0
        %v995 = vmax.f32 %v948, 0.0
        %v996 = vmax.f32 %v951, 0.0
        %v997 = vmax.f32 %v954, 0.0
        %v998 = vmax.f32 %v957, 0.0
        %v999 = vmax.f32 %v960, 0.0
        %v1000 = vmax.f32 %v963, 0.0
        %v1001 = vmax.f32 %v966, 0.0
        %v1002 = vmax.f32 %v969, 0.0
        %v1003 = vld [vmem:[%s5] sm:$0xff]
        %v1004 = vld [vmem:[%s5 + $0x8] sm:$0xff]
        %v1005 = vld [vmem:[%s5 + $0x10] sm:$0xf]
        %v1006 = vld [vmem:[%s6] sm:$0x1]
        %v1008 = vperm.slane %v1006, 0
        %vm1010 = vcmask 162816
        %v1012 = vsel %vm1010, %v971, 0
        %v1015 = vsel %vm1010, %v972, 0
        %v1018 = vsel %vm1010, %v973, 0
        %v1021 = vsel %vm1010, %v974, 0
        %v1024 = vsel %vm1010, %v975, 0
        %v1027 = vsel %vm1010, %v976, 0
        %v1030 = vsel %vm1010, %v977, 0
        %v1033 = vsel %vm1010, %v978, 0
        %v1036 = vsel %vm1010, %v979, 0
        %v1039 = vsel %vm1010, %v980, 0
        %v1042 = vsel %vm1010, %v981, 0
        %v1045 = vsel %vm1010, %v982, 0
        %v1048 = vsel %vm1010, %v983, 0
        %v1051 = vsel %vm1010, %v984, 0
        %v1054 = vsel %vm1010, %v985, 0
        %v1057 = vsel %vm1010, %v986, 0
        %v1060 = vsel %vm1010, %v987, 0
        %v1063 = vsel %vm1010, %v988, 0
        %v1066 = vsel %vm1010, %v989, 0
        %v1069 = vsel %vm1010, %v990, 0
        %v1072 = vsel %vm1010, %v991, 0
        %v1075 = vsel %vm1010, %v992, 0
        %v1078 = vsel %vm1010, %v993, 0
        %v1081 = vsel %vm1010, %v994, 0
        %v1084 = vsel %vm1010, %v995, 0
        %v1087 = vsel %vm1010, %v996, 0
        %v1090 = vsel %vm1010, %v997, 0
        %v1093 = vsel %vm1010, %v998, 0
        %v1096 = vsel %vm1010, %v999, 0
        %v1099 = vsel %vm1010, %v1000, 0
        %v1102 = vsel %vm1010, %v1001, 0
        %v1105 = vsel %vm1010, %v1002, 0
        %vm1107 = vcmask 1043456
        %v1109 = vsel %vm1107, %v1005, 0
        %1111 = vmatpush.msra.mxu0 0.0
        %1112 = vmatpush.msra.mxu0 0.0
        %1113 = vmatpush.msra.mxu0 0.0
        %1114 = vmatpush.msra.mxu0 0.0
        %1115 = vmatpush.msra.mxu0 0.0
        %1116 = vmatpush.msra.mxu0 0.0
        %1117 = vmatpush.msra.mxu0 0.0
        %1118 = vmatpush.msra.mxu0 0.0
        %1119 = vmatpush.msra.mxu0 0.0
        %1120 = vmatpush.msra.mxu0 0.0
        %1121 = vmatpush.msra.mxu0 0.0
        %1122 = vmatpush.msra.mxu0 0.0
        %1123 = vmatpush.msra.mxu0 0.0
        %1124 = vmatpush.msra.mxu0 %v1109
        %1125 = vmatpush.msra.mxu0 %v1004
        %1126 = vmatpush.msra.mxu0 %v1003
        %1127 = vmatmul.f32.gmra.mxu0 %v1012
        %v1128 = vpop.f32.mrf.mxu0
        %v1129 = vadd.f32 %v1008, %v1128
        %1130 = vmatmul.f32.gmra.mxu0 %v1015
        %v1131 = vpop.f32.mrf.mxu0
        %v1132 = vadd.f32 %v1008, %v1131
        %1133 = vmatmul.f32.gmra.mxu0 %v1018
        %v1134 = vpop.f32.mrf.mxu0
        %v1135 = vadd.f32 %v1008, %v1134
        %1136 = vmatmul.f32.gmra.mxu0 %v1021
        %v1137 = vpop.f32.mrf.mxu0
        %v1138 = vadd.f32 %v1008, %v1137
        %1139 = vmatmul.f32.gmra.mxu0 %v1024
        %v1140 = vpop.f32.mrf.mxu0
        %v1141 = vadd.f32 %v1008, %v1140
        %1142 = vmatmul.f32.gmra.mxu0 %v1027
        %v1143 = vpop.f32.mrf.mxu0
        %v1144 = vadd.f32 %v1008, %v1143
        %1145 = vmatmul.f32.gmra.mxu0 %v1030
        %v1146 = vpop.f32.mrf.mxu0
        %v1147 = vadd.f32 %v1008, %v1146
        %1148 = vmatmul.f32.gmra.mxu0 %v1033
        %v1149 = vpop.f32.mrf.mxu0
        %v1150 = vadd.f32 %v1008, %v1149
        %1151 = vmatmul.f32.gmra.mxu0 %v1036
        %v1152 = vpop.f32.mrf.mxu0
        %v1153 = vadd.f32 %v1008, %v1152
        %1154 = vmatmul.f32.gmra.mxu0 %v1039
        %v1155 = vpop.f32.mrf.mxu0
        %v1156 = vadd.f32 %v1008, %v1155
        %1157 = vmatmul.f32.gmra.mxu0 %v1042
        %v1158 = vpop.f32.mrf.mxu0
        %v1159 = vadd.f32 %v1008, %v1158
        %1160 = vmatmul.f32.gmra.mxu0 %v1045
        %v1161 = vpop.f32.mrf.mxu0
        %v1162 = vadd.f32 %v1008, %v1161
        %1163 = vmatmul.f32.gmra.mxu0 %v1048
        %v1164 = vpop.f32.mrf.mxu0
        %v1165 = vadd.f32 %v1008, %v1164
        %1166 = vmatmul.f32.gmra.mxu0 %v1051
        %v1167 = vpop.f32.mrf.mxu0
        %v1168 = vadd.f32 %v1008, %v1167
        %1169 = vmatmul.f32.gmra.mxu0 %v1054
        %v1170 = vpop.f32.mrf.mxu0
        %v1171 = vadd.f32 %v1008, %v1170
        %1172 = vmatmul.f32.gmra.mxu0 %v1057
        %v1173 = vpop.f32.mrf.mxu0
        %v1174 = vadd.f32 %v1008, %v1173
        %1175 = vmatmul.f32.gmra.mxu0 %v1060
        %v1176 = vpop.f32.mrf.mxu0
        %v1177 = vadd.f32 %v1008, %v1176
        %1178 = vmatmul.f32.gmra.mxu0 %v1063
        %v1179 = vpop.f32.mrf.mxu0
        %v1180 = vadd.f32 %v1008, %v1179
        %1181 = vmatmul.f32.gmra.mxu0 %v1066
        %v1182 = vpop.f32.mrf.mxu0
        %v1183 = vadd.f32 %v1008, %v1182
        %1184 = vmatmul.f32.gmra.mxu0 %v1069
        %v1185 = vpop.f32.mrf.mxu0
        %v1186 = vadd.f32 %v1008, %v1185
        %1187 = vmatmul.f32.gmra.mxu0 %v1072
        %v1188 = vpop.f32.mrf.mxu0
        %v1189 = vadd.f32 %v1008, %v1188
        %1190 = vmatmul.f32.gmra.mxu0 %v1075
        %v1191 = vpop.f32.mrf.mxu0
        %v1192 = vadd.f32 %v1008, %v1191
        %1193 = vmatmul.f32.gmra.mxu0 %v1078
        %v1194 = vpop.f32.mrf.mxu0
        %v1195 = vadd.f32 %v1008, %v1194
        %1196 = vmatmul.f32.gmra.mxu0 %v1081
        %v1197 = vpop.f32.mrf.mxu0
        %v1198 = vadd.f32 %v1008, %v1197
        %1199 = vmatmul.f32.gmra.mxu0 %v1084
        %v1200 = vpop.f32.mrf.mxu0
        %v1201 = vadd.f32 %v1008, %v1200
        %1202 = vmatmul.f32.gmra.mxu0 %v1087
        %v1203 = vpop.f32.mrf.mxu0
        %v1204 = vadd.f32 %v1008, %v1203
        %1205 = vmatmul.f32.gmra.mxu0 %v1090
        %v1206 = vpop.f32.mrf.mxu0
        %v1207 = vadd.f32 %v1008, %v1206
        %1208 = vmatmul.f32.gmra.mxu0 %v1093
        %v1209 = vpop.f32.mrf.mxu0
        %v1210 = vadd.f32 %v1008, %v1209
        %1211 = vmatmul.f32.gmra.mxu0 %v1096
        %v1212 = vpop.f32.mrf.mxu0
        %v1213 = vadd.f32 %v1008, %v1212
        %1214 = vmatmul.f32.gmra.mxu0 %v1099
        %v1215 = vpop.f32.mrf.mxu0
        %v1216 = vadd.f32 %v1008, %v1215
        %1217 = vmatmul.f32.gmra.mxu0 %v1102
        %v1218 = vpop.f32.mrf.mxu0
        %v1219 = vadd.f32 %v1008, %v1218
        %1220 = vmatmul.f32.gmra.mxu0 %v1105
        %v1221 = vpop.f32.mrf.mxu0
        %v1222 = vadd.f32 %v1008, %v1221
        %1223 = vdwg.mxu0
        %v1224 = vmax.f32 %v1129, 0.0
        %v1225 = vmax.f32 %v1132, 0.0
        %v1226 = vmax.f32 %v1135, 0.0
        %v1227 = vmax.f32 %v1138, 0.0
        %v1228 = vmax.f32 %v1141, 0.0
        %v1229 = vmax.f32 %v1144, 0.0
        %v1230 = vmax.f32 %v1147, 0.0
        %v1231 = vmax.f32 %v1150, 0.0
        %v1232 = vmax.f32 %v1153, 0.0
        %v1233 = vmax.f32 %v1156, 0.0
        %v1234 = vmax.f32 %v1159, 0.0
        %v1235 = vmax.f32 %v1162, 0.0
        %v1236 = vmax.f32 %v1165, 0.0
        %v1237 = vmax.f32 %v1168, 0.0
        %v1238 = vmax.f32 %v1171, 0.0
        %v1239 = vmax.f32 %v1174, 0.0
        %v1240 = vmax.f32 %v1177, 0.0
        %v1241 = vmax.f32 %v1180, 0.0
        %v1242 = vmax.f32 %v1183, 0.0
        %v1243 = vmax.f32 %v1186, 0.0
        %v1244 = vmax.f32 %v1189, 0.0
        %v1245 = vmax.f32 %v1192, 0.0
        %v1246 = vmax.f32 %v1195, 0.0
        %v1247 = vmax.f32 %v1198, 0.0
        %v1248 = vmax.f32 %v1201, 0.0
        %v1249 = vmax.f32 %v1204, 0.0
        %v1250 = vmax.f32 %v1207, 0.0
        %v1251 = vmax.f32 %v1210, 0.0
        %v1252 = vmax.f32 %v1213, 0.0
        %v1253 = vmax.f32 %v1216, 0.0
        %v1254 = vmax.f32 %v1219, 0.0
        %v1255 = vmax.f32 %v1222, 0.0
        %v1256 = vld [vmem:[%s7] sm:$0xff]
        %v1257 = vld [vmem:[%s7 + $0x8] sm:$0x7]
        %v1258 = vld [vmem:[%s8] sm:$0x1]
        %v1260 = vperm.slane %v1258, 0
        %vm1262 = vcmask 89088
        %v1264 = vsel %vm1262, %v1224, 0
        %v1267 = vsel %vm1262, %v1225, 0
        %v1270 = vsel %vm1262, %v1226, 0
        %v1273 = vsel %vm1262, %v1227, 0
        %v1276 = vsel %vm1262, %v1228, 0
        %v1279 = vsel %vm1262, %v1229, 0
        %v1282 = vsel %vm1262, %v1230, 0
        %v1285 = vsel %vm1262, %v1231, 0
        %v1288 = vsel %vm1262, %v1232, 0
        %v1291 = vsel %vm1262, %v1233, 0
        %v1294 = vsel %vm1262, %v1234, 0
        %v1297 = vsel %vm1262, %v1235, 0
        %v1300 = vsel %vm1262, %v1236, 0
        %v1303 = vsel %vm1262, %v1237, 0
        %v1306 = vsel %vm1262, %v1238, 0
        %v1309 = vsel %vm1262, %v1239, 0
        %v1312 = vsel %vm1262, %v1240, 0
        %v1315 = vsel %vm1262, %v1241, 0
        %v1318 = vsel %vm1262, %v1242, 0
        %v1321 = vsel %vm1262, %v1243, 0
        %v1324 = vsel %vm1262, %v1244, 0
        %v1327 = vsel %vm1262, %v1245, 0
        %v1330 = vsel %vm1262, %v1246, 0
        %v1333 = vsel %vm1262, %v1247, 0
        %v1336 = vsel %vm1262, %v1248, 0
        %v1339 = vsel %vm1262, %v1249, 0
        %v1342 = vsel %vm1262, %v1250, 0
        %v1345 = vsel %vm1262, %v1251, 0
        %v1348 = vsel %vm1262, %v1252, 0
        %v1351 = vsel %vm1262, %v1253, 0
        %v1354 = vsel %vm1262, %v1254, 0
        %v1357 = vsel %vm1262, %v1255, 0
        %vm1359 = vcmask 1042432
        %v1361 = vsel %vm1359, %v1257, 0
        %1363 = vmatpush.msra.mxu0 0.0
        %1364 = vmatpush.msra.mxu0 0.0
        %1365 = vmatpush.msra.mxu0 0.0
        %1366 = vmatpush.msra.mxu0 0.0
        %1367 = vmatpush.msra.mxu0 0.0
        %1368 = vmatpush.msra.mxu0 0.0
        %1369 = vmatpush.msra.mxu0 0.0
        %1370 = vmatpush.msra.mxu0 0.0
        %1371 = vmatpush.msra.mxu0 0.0
        %1372 = vmatpush.msra.mxu0 0.0
        %1373 = vmatpush.msra.mxu0 0.0
        %1374 = vmatpush.msra.mxu0 0.0
        %1375 = vmatpush.msra.mxu0 0.0
        %1376 = vmatpush.msra.mxu0 0.0
        %1377 = vmatpush.msra.mxu0 %v1361
        %1378 = vmatpush.msra.mxu0 %v1256
        %1379 = vmatmul.f32.gmra.mxu0 %v1264
        %v1380 = vpop.f32.mrf.mxu0
        %v1381 = vadd.f32 %v1260, %v1380
        %1382 = vmatmul.f32.gmra.mxu0 %v1267
        %v1383 = vpop.f32.mrf.mxu0
        %v1384 = vadd.f32 %v1260, %v1383
        %1385 = vmatmul.f32.gmra.mxu0 %v1270
        %v1386 = vpop.f32.mrf.mxu0
        %v1387 = vadd.f32 %v1260, %v1386
        %1388 = vmatmul.f32.gmra.mxu0 %v1273
        %v1389 = vpop.f32.mrf.mxu0
        %v1390 = vadd.f32 %v1260, %v1389
        %1391 = vmatmul.f32.gmra.mxu0 %v1276
        %v1392 = vpop.f32.mrf.mxu0
        %v1393 = vadd.f32 %v1260, %v1392
        %1394 = vmatmul.f32.gmra.mxu0 %v1279
        %v1395 = vpop.f32.mrf.mxu0
        %v1396 = vadd.f32 %v1260, %v1395
        %1397 = vmatmul.f32.gmra.mxu0 %v1282
        %v1398 = vpop.f32.mrf.mxu0
        %v1399 = vadd.f32 %v1260, %v1398
        %1400 = vmatmul.f32.gmra.mxu0 %v1285
        %v1401 = vpop.f32.mrf.mxu0
        %v1402 = vadd.f32 %v1260, %v1401
        %1403 = vmatmul.f32.gmra.mxu0 %v1288
        %v1404 = vpop.f32.mrf.mxu0
        %v1405 = vadd.f32 %v1260, %v1404
        %1406 = vmatmul.f32.gmra.mxu0 %v1291
        %v1407 = vpop.f32.mrf.mxu0
        %v1408 = vadd.f32 %v1260, %v1407
        %1409 = vmatmul.f32.gmra.mxu0 %v1294
        %v1410 = vpop.f32.mrf.mxu0
        %v1411 = vadd.f32 %v1260, %v1410
        %1412 = vmatmul.f32.gmra.mxu0 %v1297
        %v1413 = vpop.f32.mrf.mxu0
        %v1414 = vadd.f32 %v1260, %v1413
        %1415 = vmatmul.f32.gmra.mxu0 %v1300
        %v1416 = vpop.f32.mrf.mxu0
        %v1417 = vadd.f32 %v1260, %v1416
        %1418 = vmatmul.f32.gmra.mxu0 %v1303
        %v1419 = vpop.f32.mrf.mxu0
        %v1420 = vadd.f32 %v1260, %v1419
        %1421 = vmatmul.f32.gmra.mxu0 %v1306
        %v1422 = vpop.f32.mrf.mxu0
        %v1423 = vadd.f32 %v1260, %v1422
        %1424 = vmatmul.f32.gmra.mxu0 %v1309
        %v1425 = vpop.f32.mrf.mxu0
        %v1426 = vadd.f32 %v1260, %v1425
        %1427 = vmatmul.f32.gmra.mxu0 %v1312
        %v1428 = vpop.f32.mrf.mxu0
        %v1429 = vadd.f32 %v1260, %v1428
        %1430 = vmatmul.f32.gmra.mxu0 %v1315
        %v1431 = vpop.f32.mrf.mxu0
        %v1432 = vadd.f32 %v1260, %v1431
        %1433 = vmatmul.f32.gmra.mxu0 %v1318
        %v1434 = vpop.f32.mrf.mxu0
        %v1435 = vadd.f32 %v1260, %v1434
        %1436 = vmatmul.f32.gmra.mxu0 %v1321
        %v1437 = vpop.f32.mrf.mxu0
        %v1438 = vadd.f32 %v1260, %v1437
        %1439 = vmatmul.f32.gmra.mxu0 %v1324
        %v1440 = vpop.f32.mrf.mxu0
        %v1441 = vadd.f32 %v1260, %v1440
        %1442 = vmatmul.f32.gmra.mxu0 %v1327
        %v1443 = vpop.f32.mrf.mxu0
        %v1444 = vadd.f32 %v1260, %v1443
        %1445 = vmatmul.f32.gmra.mxu0 %v1330
        %v1446 = vpop.f32.mrf.mxu0
        %v1447 = vadd.f32 %v1260, %v1446
        %1448 = vmatmul.f32.gmra.mxu0 %v1333
        %v1449 = vpop.f32.mrf.mxu0
        %v1450 = vadd.f32 %v1260, %v1449
        %1451 = vmatmul.f32.gmra.mxu0 %v1336
        %v1452 = vpop.f32.mrf.mxu0
        %v1453 = vadd.f32 %v1260, %v1452
        %1454 = vmatmul.f32.gmra.mxu0 %v1339
        %v1455 = vpop.f32.mrf.mxu0
        %v1456 = vadd.f32 %v1260, %v1455
        %1457 = vmatmul.f32.gmra.mxu0 %v1342
        %v1458 = vpop.f32.mrf.mxu0
        %v1459 = vadd.f32 %v1260, %v1458
        %1460 = vmatmul.f32.gmra.mxu0 %v1345
        %v1461 = vpop.f32.mrf.mxu0
        %v1462 = vadd.f32 %v1260, %v1461
        %1463 = vmatmul.f32.gmra.mxu0 %v1348
        %v1464 = vpop.f32.mrf.mxu0
        %v1465 = vadd.f32 %v1260, %v1464
        %1466 = vmatmul.f32.gmra.mxu0 %v1351
        %v1467 = vpop.f32.mrf.mxu0
        %v1468 = vadd.f32 %v1260, %v1467
        %1469 = vmatmul.f32.gmra.mxu0 %v1354
        %v1470 = vpop.f32.mrf.mxu0
        %v1471 = vadd.f32 %v1260, %v1470
        %1472 = vmatmul.f32.gmra.mxu0 %v1357
        %v1473 = vpop.f32.mrf.mxu0
        %v1474 = vadd.f32 %v1260, %v1473
        %1475 = vdwg.mxu0
        %v1476 = vmax.f32 %v1381, 0.0
        %v1477 = vmax.f32 %v1384, 0.0
        %v1478 = vmax.f32 %v1387, 0.0
        %v1479 = vmax.f32 %v1390, 0.0
        %v1480 = vmax.f32 %v1393, 0.0
        %v1481 = vmax.f32 %v1396, 0.0
        %v1482 = vmax.f32 %v1399, 0.0
        %v1483 = vmax.f32 %v1402, 0.0
        %v1484 = vmax.f32 %v1405, 0.0
        %v1485 = vmax.f32 %v1408, 0.0
        %v1486 = vmax.f32 %v1411, 0.0
        %v1487 = vmax.f32 %v1414, 0.0
        %v1488 = vmax.f32 %v1417, 0.0
        %v1489 = vmax.f32 %v1420, 0.0
        %v1490 = vmax.f32 %v1423, 0.0
        %v1491 = vmax.f32 %v1426, 0.0
        %v1492 = vmax.f32 %v1429, 0.0
        %v1493 = vmax.f32 %v1432, 0.0
        %v1494 = vmax.f32 %v1435, 0.0
        %v1495 = vmax.f32 %v1438, 0.0
        %v1496 = vmax.f32 %v1441, 0.0
        %v1497 = vmax.f32 %v1444, 0.0
        %v1498 = vmax.f32 %v1447, 0.0
        %v1499 = vmax.f32 %v1450, 0.0
        %v1500 = vmax.f32 %v1453, 0.0
        %v1501 = vmax.f32 %v1456, 0.0
        %v1502 = vmax.f32 %v1459, 0.0
        %v1503 = vmax.f32 %v1462, 0.0
        %v1504 = vmax.f32 %v1465, 0.0
        %v1505 = vmax.f32 %v1468, 0.0
        %v1506 = vmax.f32 %v1471, 0.0
        %v1507 = vmax.f32 %v1474, 0.0
        %v1508 = vld [vmem:[%s9] sm:$0xff]
        %v1509 = vld [vmem:[%s9 + $0x8] sm:$0xff]
        %v1510 = vld [vmem:[%s9 + $0x10] sm:$0xf]
        %v1511 = vld [vmem:[%s10] sm:$0x1]
        %v1513 = vperm.slane %v1511, 0
        %v1516 = vsel %vm1010, %v1476, 0
        %v1519 = vsel %vm1010, %v1477, 0
        %v1522 = vsel %vm1010, %v1478, 0
        %v1525 = vsel %vm1010, %v1479, 0
        %v1528 = vsel %vm1010, %v1480, 0
        %v1531 = vsel %vm1010, %v1481, 0
        %v1534 = vsel %vm1010, %v1482, 0
        %v1537 = vsel %vm1010, %v1483, 0
        %v1540 = vsel %vm1010, %v1484, 0
        %v1543 = vsel %vm1010, %v1485, 0
        %v1546 = vsel %vm1010, %v1486, 0
        %v1549 = vsel %vm1010, %v1487, 0
        %v1552 = vsel %vm1010, %v1488, 0
        %v1555 = vsel %vm1010, %v1489, 0
        %v1558 = vsel %vm1010, %v1490, 0
        %v1561 = vsel %vm1010, %v1491, 0
        %v1564 = vsel %vm1010, %v1492, 0
        %v1567 = vsel %vm1010, %v1493, 0
        %v1570 = vsel %vm1010, %v1494, 0
        %v1573 = vsel %vm1010, %v1495, 0
        %v1576 = vsel %vm1010, %v1496, 0
        %v1579 = vsel %vm1010, %v1497, 0
        %v1582 = vsel %vm1010, %v1498, 0
        %v1585 = vsel %vm1010, %v1499, 0
        %v1588 = vsel %vm1010, %v1500, 0
        %v1591 = vsel %vm1010, %v1501, 0
        %v1594 = vsel %vm1010, %v1502, 0
        %v1597 = vsel %vm1010, %v1503, 0
        %v1600 = vsel %vm1010, %v1504, 0
        %v1603 = vsel %vm1010, %v1505, 0
        %v1606 = vsel %vm1010, %v1506, 0
        %v1609 = vsel %vm1010, %v1507, 0
        %v1612 = vsel %vm1107, %v1510, 0
        %1614 = vmatpush.msra.mxu0 0.0
        %1615 = vmatpush.msra.mxu0 0.0
        %1616 = vmatpush.msra.mxu0 0.0
        %1617 = vmatpush.msra.mxu0 0.0
        %1618 = vmatpush.msra.mxu0 0.0
        %1619 = vmatpush.msra.mxu0 0.0
        %1620 = vmatpush.msra.mxu0 0.0
        %1621 = vmatpush.msra.mxu0 0.0
        %1622 = vmatpush.msra.mxu0 0.0
        %1623 = vmatpush.msra.mxu0 0.0
        %1624 = vmatpush.msra.mxu0 0.0
        %1625 = vmatpush.msra.mxu0 0.0
        %1626 = vmatpush.msra.mxu0 0.0
        %1627 = vmatpush.msra.mxu0 %v1612
        %1628 = vmatpush.msra.mxu0 %v1509
        %1629 = vmatpush.msra.mxu0 %v1508
        %1630 = vmatmul.f32.gmra.mxu0 %v1516
        %v1631 = vpop.f32.mrf.mxu0
        %v1632 = vadd.f32 %v1513, %v1631
        %1633 = vmatmul.f32.gmra.mxu0 %v1519
        %v1634 = vpop.f32.mrf.mxu0
        %v1635 = vadd.f32 %v1513, %v1634
        %1636 = vmatmul.f32.gmra.mxu0 %v1522
        %v1637 = vpop.f32.mrf.mxu0
        %v1638 = vadd.f32 %v1513, %v1637
        %1639 = vmatmul.f32.gmra.mxu0 %v1525
        %v1640 = vpop.f32.mrf.mxu0
        %v1641 = vadd.f32 %v1513, %v1640
        %1642 = vmatmul.f32.gmra.mxu0 %v1528
        %v1643 = vpop.f32.mrf.mxu0
        %v1644 = vadd.f32 %v1513, %v1643
        %1645 = vmatmul.f32.gmra.mxu0 %v1531
        %v1646 = vpop.f32.mrf.mxu0
        %v1647 = vadd.f32 %v1513, %v1646
        %1648 = vmatmul.f32.gmra.mxu0 %v1534
        %v1649 = vpop.f32.mrf.mxu0
        %v1650 = vadd.f32 %v1513, %v1649
        %1651 = vmatmul.f32.gmra.mxu0 %v1537
        %v1652 = vpop.f32.mrf.mxu0
        %v1653 = vadd.f32 %v1513, %v1652
        %1654 = vmatmul.f32.gmra.mxu0 %v1540
        %v1655 = vpop.f32.mrf.mxu0
        %v1656 = vadd.f32 %v1513, %v1655
        %1657 = vmatmul.f32.gmra.mxu0 %v1543
        %v1658 = vpop.f32.mrf.mxu0
        %v1659 = vadd.f32 %v1513, %v1658
        %1660 = vmatmul.f32.gmra.mxu0 %v1546
        %v1661 = vpop.f32.mrf.mxu0
        %v1662 = vadd.f32 %v1513, %v1661
        %1663 = vmatmul.f32.gmra.mxu0 %v1549
        %v1664 = vpop.f32.mrf.mxu0
        %v1665 = vadd.f32 %v1513, %v1664
        %1666 = vmatmul.f32.gmra.mxu0 %v1552
        %v1667 = vpop.f32.mrf.mxu0
        %v1668 = vadd.f32 %v1513, %v1667
        %1669 = vmatmul.f32.gmra.mxu0 %v1555
        %v1670 = vpop.f32.mrf.mxu0
        %v1671 = vadd.f32 %v1513, %v1670
        %1672 = vmatmul.f32.gmra.mxu0 %v1558
        %v1673 = vpop.f32.mrf.mxu0
        %v1674 = vadd.f32 %v1513, %v1673
        %1675 = vmatmul.f32.gmra.mxu0 %v1561
        %v1676 = vpop.f32.mrf.mxu0
        %v1677 = vadd.f32 %v1513, %v1676
        %1678 = vmatmul.f32.gmra.mxu0 %v1564
        %v1679 = vpop.f32.mrf.mxu0
        %v1680 = vadd.f32 %v1513, %v1679
        %1681 = vmatmul.f32.gmra.mxu0 %v1567
        %v1682 = vpop.f32.mrf.mxu0
        %v1683 = vadd.f32 %v1513, %v1682
        %1684 = vmatmul.f32.gmra.mxu0 %v1570
        %v1685 = vpop.f32.mrf.mxu0
        %v1686 = vadd.f32 %v1513, %v1685
        %1687 = vmatmul.f32.gmra.mxu0 %v1573
        %v1688 = vpop.f32.mrf.mxu0
        %v1689 = vadd.f32 %v1513, %v1688
        %1690 = vmatmul.f32.gmra.mxu0 %v1576
        %v1691 = vpop.f32.mrf.mxu0
        %v1692 = vadd.f32 %v1513, %v1691
        %1693 = vmatmul.f32.gmra.mxu0 %v1579
        %v1694 = vpop.f32.mrf.mxu0
        %v1695 = vadd.f32 %v1513, %v1694
        %1696 = vmatmul.f32.gmra.mxu0 %v1582
        %v1697 = vpop.f32.mrf.mxu0
        %v1698 = vadd.f32 %v1513, %v1697
        %1699 = vmatmul.f32.gmra.mxu0 %v1585
        %v1700 = vpop.f32.mrf.mxu0
        %v1701 = vadd.f32 %v1513, %v1700
        %1702 = vmatmul.f32.gmra.mxu0 %v1588
        %v1703 = vpop.f32.mrf.mxu0
        %v1704 = vadd.f32 %v1513, %v1703
        %1705 = vmatmul.f32.gmra.mxu0 %v1591
        %v1706 = vpop.f32.mrf.mxu0
        %v1707 = vadd.f32 %v1513, %v1706
        %1708 = vmatmul.f32.gmra.mxu0 %v1594
        %v1709 = vpop.f32.mrf.mxu0
        %v1710 = vadd.f32 %v1513, %v1709
        %1711 = vmatmul.f32.gmra.mxu0 %v1597
        %v1712 = vpop.f32.mrf.mxu0
        %v1713 = vadd.f32 %v1513, %v1712
        %1714 = vmatmul.f32.gmra.mxu0 %v1600
        %v1715 = vpop.f32.mrf.mxu0
        %v1716 = vadd.f32 %v1513, %v1715
        %1717 = vmatmul.f32.gmra.mxu0 %v1603
        %v1718 = vpop.f32.mrf.mxu0
        %v1719 = vadd.f32 %v1513, %v1718
        %1720 = vmatmul.f32.gmra.mxu0 %v1606
        %v1721 = vpop.f32.mrf.mxu0
        %v1722 = vadd.f32 %v1513, %v1721
        %1723 = vmatmul.f32.gmra.mxu0 %v1609
        %v1724 = vpop.f32.mrf.mxu0
        %v1725 = vadd.f32 %v1513, %v1724
        %1726 = vdwg.mxu0
        %v1727 = vmax.f32 %v1632, 0.0
        %v1728 = vmax.f32 %v1635, 0.0
        %v1729 = vmax.f32 %v1638, 0.0
        %v1730 = vmax.f32 %v1641, 0.0
        %v1731 = vmax.f32 %v1644, 0.0
        %v1732 = vmax.f32 %v1647, 0.0
        %v1733 = vmax.f32 %v1650, 0.0
        %v1734 = vmax.f32 %v1653, 0.0
        %v1735 = vmax.f32 %v1656, 0.0
        %v1736 = vmax.f32 %v1659, 0.0
        %v1737 = vmax.f32 %v1662, 0.0
        %v1738 = vmax.f32 %v1665, 0.0
        %v1739 = vmax.f32 %v1668, 0.0
        %v1740 = vmax.f32 %v1671, 0.0
        %v1741 = vmax.f32 %v1674, 0.0
        %v1742 = vmax.f32 %v1677, 0.0
        %v1743 = vmax.f32 %v1680, 0.0
        %v1744 = vmax.f32 %v1683, 0.0
        %v1745 = vmax.f32 %v1686, 0.0
        %v1746 = vmax.f32 %v1689, 0.0
        %v1747 = vmax.f32 %v1692, 0.0
        %v1748 = vmax.f32 %v1695, 0.0
        %v1749 = vmax.f32 %v1698, 0.0
        %v1750 = vmax.f32 %v1701, 0.0
        %v1751 = vmax.f32 %v1704, 0.0
        %v1752 = vmax.f32 %v1707, 0.0
        %v1753 = vmax.f32 %v1710, 0.0
        %v1754 = vmax.f32 %v1713, 0.0
        %v1755 = vmax.f32 %v1716, 0.0
        %v1756 = vmax.f32 %v1719, 0.0
        %v1757 = vmax.f32 %v1722, 0.0
        %v1758 = vmax.f32 %v1725, 0.0
        %v1759 = vld [vmem:[%s11] sm:$0xff]
        %v1760 = vld [vmem:[%s11 + $0x8] sm:$0xff]
        %v1761 = vld [vmem:[%s11 + $0x10] sm:$0xff]
        %v1762 = vld [vmem:[%s11 + $0x18] sm:$0xff]
        %v1763 = vld [vmem:[%s11 + $0x20] sm:$0xff]
        %v1764 = vld [vmem:[%s12] sm:$0x1]
        %v1766 = vperm.slane %v1764, 0
        %v1769 = vsel %vm761, %v1727, 0
        %v1772 = vsel %vm761, %v1728, 0
        %v1775 = vsel %vm761, %v1729, 0
        %v1778 = vsel %vm761, %v1730, 0
        %v1781 = vsel %vm761, %v1731, 0
        %v1784 = vsel %vm761, %v1732, 0
        %v1787 = vsel %vm761, %v1733, 0
        %v1790 = vsel %vm761, %v1734, 0
        %v1793 = vsel %vm761, %v1735, 0
        %v1796 = vsel %vm761, %v1736, 0
        %v1799 = vsel %vm761, %v1737, 0
        %v1802 = vsel %vm761, %v1738, 0
        %v1805 = vsel %vm761, %v1739, 0
        %v1808 = vsel %vm761, %v1740, 0
        %v1811 = vsel %vm761, %v1741, 0
        %v1814 = vsel %vm761, %v1742, 0
        %v1817 = vsel %vm761, %v1743, 0
        %v1820 = vsel %vm761, %v1744, 0
        %v1823 = vsel %vm761, %v1745, 0
        %v1826 = vsel %vm761, %v1746, 0
        %v1829 = vsel %vm761, %v1747, 0
        %v1832 = vsel %vm761, %v1748, 0
        %v1835 = vsel %vm761, %v1749, 0
        %v1838 = vsel %vm761, %v1750, 0
        %v1841 = vsel %vm761, %v1751, 0
        %v1844 = vsel %vm761, %v1752, 0
        %v1847 = vsel %vm761, %v1753, 0
        %v1850 = vsel %vm761, %v1754, 0
        %v1853 = vsel %vm761, %v1755, 0
        %v1856 = vsel %vm761, %v1756, 0
        %v1859 = vsel %vm761, %v1757, 0
        %v1862 = vsel %vm761, %v1758, 0
        %1864 = vmatpush.msra.mxu0 0.0
        %1865 = vmatpush.msra.mxu0 0.0
        %1866 = vmatpush.msra.mxu0 0.0
        %1867 = vmatpush.msra.mxu0 0.0
        %1868 = vmatpush.msra.mxu0 0.0
        %1869 = vmatpush.msra.mxu0 0.0
        %1870 = vmatpush.msra.mxu0 0.0
        %1871 = vmatpush.msra.mxu0 0.0
        %1872 = vmatpush.msra.mxu0 0.0
        %1873 = vmatpush.msra.mxu0 0.0
        %1874 = vmatpush.msra.mxu0 0.0
        %1875 = vmatpush.msra.mxu0 %v1763
        %1876 = vmatpush.msra.mxu0 %v1762
        %1877 = vmatpush.msra.mxu0 %v1761
        %1878 = vmatpush.msra.mxu0 %v1760
        %1879 = vmatpush.msra.mxu0 %v1759
        %1880 = vmatmul.f32.gmra.mxu0 %v1769
        %v1881 = vpop.f32.mrf.mxu0
        %v1882 = vadd.f32 %v1766, %v1881
        %1883 = vmatmul.f32.gmra.mxu0 %v1772
        %v1884 = vpop.f32.mrf.mxu0
        %v1885 = vadd.f32 %v1766, %v1884
        %1886 = vmatmul.f32.gmra.mxu0 %v1775
        %v1887 = vpop.f32.mrf.mxu0
        %v1888 = vadd.f32 %v1766, %v1887
        %1889 = vmatmul.f32.gmra.mxu0 %v1778
        %v1890 = vpop.f32.mrf.mxu0
        %v1891 = vadd.f32 %v1766, %v1890
        %1892 = vmatmul.f32.gmra.mxu0 %v1781
        %v1893 = vpop.f32.mrf.mxu0
        %v1894 = vadd.f32 %v1766, %v1893
        %1895 = vmatmul.f32.gmra.mxu0 %v1784
        %v1896 = vpop.f32.mrf.mxu0
        %v1897 = vadd.f32 %v1766, %v1896
        %1898 = vmatmul.f32.gmra.mxu0 %v1787
        %v1899 = vpop.f32.mrf.mxu0
        %v1900 = vadd.f32 %v1766, %v1899
        %1901 = vmatmul.f32.gmra.mxu0 %v1790
        %v1902 = vpop.f32.mrf.mxu0
        %v1903 = vadd.f32 %v1766, %v1902
        %1904 = vmatmul.f32.gmra.mxu0 %v1793
        %v1905 = vpop.f32.mrf.mxu0
        %v1906 = vadd.f32 %v1766, %v1905
        %1907 = vmatmul.f32.gmra.mxu0 %v1796
        %v1908 = vpop.f32.mrf.mxu0
        %v1909 = vadd.f32 %v1766, %v1908
        %1910 = vmatmul.f32.gmra.mxu0 %v1799
        %v1911 = vpop.f32.mrf.mxu0
        %v1912 = vadd.f32 %v1766, %v1911
        %1913 = vmatmul.f32.gmra.mxu0 %v1802
        %v1914 = vpop.f32.mrf.mxu0
        %v1915 = vadd.f32 %v1766, %v1914
        %1916 = vmatmul.f32.gmra.mxu0 %v1805
        %v1917 = vpop.f32.mrf.mxu0
        %v1918 = vadd.f32 %v1766, %v1917
        %1919 = vmatmul.f32.gmra.mxu0 %v1808
        %v1920 = vpop.f32.mrf.mxu0
        %v1921 = vadd.f32 %v1766, %v1920
        %1922 = vmatmul.f32.gmra.mxu0 %v1811
        %v1923 = vpop.f32.mrf.mxu0
        %v1924 = vadd.f32 %v1766, %v1923
        %1925 = vmatmul.f32.gmra.mxu0 %v1814
        %v1926 = vpop.f32.mrf.mxu0
        %v1927 = vadd.f32 %v1766, %v1926
        %1928 = vmatmul.f32.gmra.mxu0 %v1817
        %v1929 = vpop.f32.mrf.mxu0
        %v1930 = vadd.f32 %v1766, %v1929
        %1931 = vmatmul.f32.gmra.mxu0 %v1820
        %v1932 = vpop.f32.mrf.mxu0
        %v1933 = vadd.f32 %v1766, %v1932
        %1934 = vmatmul.f32.gmra.mxu0 %v1823
        %v1935 = vpop.f32.mrf.mxu0
        %v1936 = vadd.f32 %v1766, %v1935
        %1937 = vmatmul.f32.gmra.mxu0 %v1826
        %v1938 = vpop.f32.mrf.mxu0
        %v1939 = vadd.f32 %v1766, %v1938
        %1940 = vmatmul.f32.gmra.mxu0 %v1829
        %v1941 = vpop.f32.mrf.mxu0
        %v1942 = vadd.f32 %v1766, %v1941
        %1943 = vmatmul.f32.gmra.mxu0 %v1832
        %v1944 = vpop.f32.mrf.mxu0
        %v1945 = vadd.f32 %v1766, %v1944
        %1946 = vmatmul.f32.gmra.mxu0 %v1835
        %v1947 = vpop.f32.mrf.mxu0
        %v1948 = vadd.f32 %v1766, %v1947
        %1949 = vmatmul.f32.gmra.mxu0 %v1838
        %v1950 = vpop.f32.mrf.mxu0
        %v1951 = vadd.f32 %v1766, %v1950
        %1952 = vmatmul.f32.gmra.mxu0 %v1841
        %v1953 = vpop.f32.mrf.mxu0
        %v1954 = vadd.f32 %v1766, %v1953
        %1955 = vmatmul.f32.gmra.mxu0 %v1844
        %v1956 = vpop.f32.mrf.mxu0
        %v1957 = vadd.f32 %v1766, %v1956
        %1958 = vmatmul.f32.gmra.mxu0 %v1847
        %v1959 = vpop.f32.mrf.mxu0
        %v1960 = vadd.f32 %v1766, %v1959
        %1961 = vmatmul.f32.gmra.mxu0 %v1850
        %v1962 = vpop.f32.mrf.mxu0
        %v1963 = vadd.f32 %v1766, %v1962
        %1964 = vmatmul.f32.gmra.mxu0 %v1853
        %v1965 = vpop.f32.mrf.mxu0
        %v1966 = vadd.f32 %v1766, %v1965
        %1967 = vmatmul.f32.gmra.mxu0 %v1856
        %v1968 = vpop.f32.mrf.mxu0
        %v1969 = vadd.f32 %v1766, %v1968
        %1970 = vmatmul.f32.gmra.mxu0 %v1859
        %v1971 = vpop.f32.mrf.mxu0
        %v1972 = vadd.f32 %v1766, %v1971
        %1973 = vmatmul.f32.gmra.mxu0 %v1862
        %v1974 = vpop.f32.mrf.mxu0
        %v1975 = vadd.f32 %v1766, %v1974
        %1976 = vdwg.mxu0
        %v1977 = vxor.u32 %v1882, 2147483648
        %v1978 = vxor.u32 %v1885, 2147483648
        %v1979 = vxor.u32 %v1888, 2147483648
        %v1980 = vxor.u32 %v1891, 2147483648
        %v1981 = vxor.u32 %v1894, 2147483648
        %v1982 = vxor.u32 %v1897, 2147483648
        %v1983 = vxor.u32 %v1900, 2147483648
        %v1984 = vxor.u32 %v1903, 2147483648
        %v1985 = vxor.u32 %v1906, 2147483648
        %v1986 = vxor.u32 %v1909, 2147483648
        %v1987 = vxor.u32 %v1912, 2147483648
        %v1988 = vxor.u32 %v1915, 2147483648
        %v1989 = vxor.u32 %v1918, 2147483648
        %v1990 = vxor.u32 %v1921, 2147483648
        %v1991 = vxor.u32 %v1924, 2147483648
        %v1992 = vxor.u32 %v1927, 2147483648
        %v1993 = vxor.u32 %v1930, 2147483648
        %v1994 = vxor.u32 %v1933, 2147483648
        %v1995 = vxor.u32 %v1936, 2147483648
        %v1996 = vxor.u32 %v1939, 2147483648
        %v1997 = vxor.u32 %v1942, 2147483648
        %v1998 = vxor.u32 %v1945, 2147483648
        %v1999 = vxor.u32 %v1948, 2147483648
        %v2000 = vxor.u32 %v1951, 2147483648
        %v2001 = vxor.u32 %v1954, 2147483648
        %v2002 = vxor.u32 %v1957, 2147483648
        %v2003 = vxor.u32 %v1960, 2147483648
        %v2004 = vxor.u32 %v1963, 2147483648
        %v2005 = vxor.u32 %v1966, 2147483648
        %v2006 = vxor.u32 %v1969, 2147483648
        %v2007 = vxor.u32 %v1972, 2147483648
        %v2008 = vxor.u32 %v1975, 2147483648
        %v2009 = vmul.f32 %v1977, 1.442695
        %v2010 = vpow.pop %v2009
        %v2011 = vmul.f32 %v1978, 1.442695
        %v2012 = vpow.pop %v2011
        %v2013 = vmul.f32 %v1979, 1.442695
        %v2014 = vpow.pop %v2013
        %v2015 = vmul.f32 %v1980, 1.442695
        %v2016 = vpow.pop %v2015
        %v2017 = vmul.f32 %v1981, 1.442695
        %v2018 = vpow.pop %v2017
        %v2019 = vmul.f32 %v1982, 1.442695
        %v2020 = vpow.pop %v2019
        %v2021 = vmul.f32 %v1983, 1.442695
        %v2022 = vpow.pop %v2021
        %v2023 = vmul.f32 %v1984, 1.442695
        %v2024 = vpow.pop %v2023
        %v2025 = vmul.f32 %v1985, 1.442695
        %v2026 = vpow.pop %v2025
        %v2027 = vmul.f32 %v1986, 1.442695
        %v2028 = vpow.pop %v2027
        %v2029 = vmul.f32 %v1987, 1.442695
        %v2030 = vpow.pop %v2029
        %v2031 = vmul.f32 %v1988, 1.442695
        %v2032 = vpow.pop %v2031
        %v2033 = vmul.f32 %v1989, 1.442695
        %v2034 = vpow.pop %v2033
        %v2035 = vmul.f32 %v1990, 1.442695
        %v2036 = vpow.pop %v2035
        %v2037 = vmul.f32 %v1991, 1.442695
        %v2038 = vpow.pop %v2037
        %v2039 = vmul.f32 %v1992, 1.442695
        %v2040 = vpow.pop %v2039
        %v2041 = vmul.f32 %v1993, 1.442695
        %v2042 = vpow.pop %v2041
        %v2043 = vmul.f32 %v1994, 1.442695
        %v2044 = vpow.pop %v2043
        %v2045 = vmul.f32 %v1995, 1.442695
        %v2046 = vpow.pop %v2045
        %v2047 = vmul.f32 %v1996, 1.442695
        %v2048 = vpow.pop %v2047
        %v2049 = vmul.f32 %v1997, 1.442695
        %v2050 = vpow.pop %v2049
        %v2051 = vmul.f32 %v1998, 1.442695
        %v2052 = vpow.pop %v2051
        %v2053 = vmul.f32 %v1999, 1.442695
        %v2054 = vpow.pop %v2053
        %v2055 = vmul.f32 %v2000, 1.442695
        %v2056 = vpow.pop %v2055
        %v2057 = vmul.f32 %v2001, 1.442695
        %v2058 = vpow.pop %v2057
        %v2059 = vmul.f32 %v2002, 1.442695
        %v2060 = vpow.pop %v2059
        %v2061 = vmul.f32 %v2003, 1.442695
        %v2062 = vpow.pop %v2061
        %v2063 = vmul.f32 %v2004, 1.442695
        %v2064 = vpow.pop %v2063
        %v2065 = vmul.f32 %v2005, 1.442695
        %v2066 = vpow.pop %v2065
        %v2067 = vmul.f32 %v2006, 1.442695
        %v2068 = vpow.pop %v2067
        %v2069 = vmul.f32 %v2007, 1.442695
        %v2070 = vpow.pop %v2069
        %v2071 = vmul.f32 %v2008, 1.442695
        %v2072 = vpow.pop %v2071
        %v2073 = vadd.f32 %v2010, 1.0
        %v2074 = vadd.f32 %v2012, 1.0
        %v2075 = vadd.f32 %v2014, 1.0
        %v2076 = vadd.f32 %v2016, 1.0
        %v2077 = vadd.f32 %v2018, 1.0
        %v2078 = vadd.f32 %v2020, 1.0
        %v2079 = vadd.f32 %v2022, 1.0
        %v2080 = vadd.f32 %v2024, 1.0
        %v2081 = vadd.f32 %v2026, 1.0
        %v2082 = vadd.f32 %v2028, 1.0
        %v2083 = vadd.f32 %v2030, 1.0
        %v2084 = vadd.f32 %v2032, 1.0
        %v2085 = vadd.f32 %v2034, 1.0
        %v2086 = vadd.f32 %v2036, 1.0
        %v2087 = vadd.f32 %v2038, 1.0
        %v2088 = vadd.f32 %v2040, 1.0
        %v2089 = vadd.f32 %v2042, 1.0
        %v2090 = vadd.f32 %v2044, 1.0
        %v2091 = vadd.f32 %v2046, 1.0
        %v2092 = vadd.f32 %v2048, 1.0
        %v2093 = vadd.f32 %v2050, 1.0
        %v2094 = vadd.f32 %v2052, 1.0
        %v2095 = vadd.f32 %v2054, 1.0
        %v2096 = vadd.f32 %v2056, 1.0
        %v2097 = vadd.f32 %v2058, 1.0
        %v2098 = vadd.f32 %v2060, 1.0
        %v2099 = vadd.f32 %v2062, 1.0
        %v2100 = vadd.f32 %v2064, 1.0
        %v2101 = vadd.f32 %v2066, 1.0
        %v2102 = vadd.f32 %v2068, 1.0
        %v2103 = vadd.f32 %v2070, 1.0
        %v2104 = vadd.f32 %v2072, 1.0
        %v2105 = vrcp.pop %v2073
        %v2106 = vmul.f32 %v2073, %v2105
        %v2107 = vsub.f32 1.0, %v2106
        %v2108 = vmul.f32 %v2105, %v2107
        %v2109 = vadd.f32 %v2105, %v2108
        %vm2110 = vweird.f32 %v2073
        %vm2111 = vweird.f32 %v2105
        %vm2112 = vmor %vm2110, %vm2111
        %v2113 = vsel %vm2112, %v2105, %v2109
        %v2114 = vand.u32 2147483647, %v2073
        %vm2115 = vcmp.eq.f32.partialorder %v2114, 8.507059e+37
        %v2116 = vand.u32 %v2073, 2147483648
        %v2117 = vor.u32 1.1754944e-38, %v2116
        %v2118 = vsel %vm2115, %v2117, %v2113
        %v2119 = vmul.f32 1.0, %v2118
        %v2120 = vrcp.pop %v2074
        %v2121 = vmul.f32 %v2074, %v2120
        %v2122 = vsub.f32 1.0, %v2121
        %v2123 = vmul.f32 %v2120, %v2122
        %v2124 = vadd.f32 %v2120, %v2123
        %vm2125 = vweird.f32 %v2074
        %vm2126 = vweird.f32 %v2120
        %vm2127 = vmor %vm2125, %vm2126
        %v2128 = vsel %vm2127, %v2120, %v2124
        %v2129 = vand.u32 2147483647, %v2074
        %vm2130 = vcmp.eq.f32.partialorder %v2129, 8.507059e+37
        %v2131 = vand.u32 %v2074, 2147483648
        %v2132 = vor.u32 1.1754944e-38, %v2131
        %v2133 = vsel %vm2130, %v2132, %v2128
        %v2134 = vmul.f32 1.0, %v2133
        %v2135 = vrcp.pop %v2075
        %v2136 = vmul.f32 %v2075, %v2135
        %v2137 = vsub.f32 1.0, %v2136
        %v2138 = vmul.f32 %v2135, %v2137
        %v2139 = vadd.f32 %v2135, %v2138
        %vm2140 = vweird.f32 %v2075
        %vm2141 = vweird.f32 %v2135
        %vm2142 = vmor %vm2140, %vm2141
        %v2143 = vsel %vm2142, %v2135, %v2139
        %v2144 = vand.u32 2147483647, %v2075
        %vm2145 = vcmp.eq.f32.partialorder %v2144, 8.507059e+37
        %v2146 = vand.u32 %v2075, 2147483648
        %v2147 = vor.u32 1.1754944e-38, %v2146
        %v2148 = vsel %vm2145, %v2147, %v2143
        %v2149 = vmul.f32 1.0, %v2148
        %v2150 = vrcp.pop %v2076
        %v2151 = vmul.f32 %v2076, %v2150
        %v2152 = vsub.f32 1.0, %v2151
        %v2153 = vmul.f32 %v2150, %v2152
        %v2154 = vadd.f32 %v2150, %v2153
        %vm2155 = vweird.f32 %v2076
        %vm2156 = vweird.f32 %v2150
        %vm2157 = vmor %vm2155, %vm2156
        %v2158 = vsel %vm2157, %v2150, %v2154
        %v2159 = vand.u32 2147483647, %v2076
        %vm2160 = vcmp.eq.f32.partialorder %v2159, 8.507059e+37
        %v2161 = vand.u32 %v2076, 2147483648
        %v2162 = vor.u32 1.1754944e-38, %v2161
        %v2163 = vsel %vm2160, %v2162, %v2158
        %v2164 = vmul.f32 1.0, %v2163
        %v2165 = vrcp.pop %v2077
        %v2166 = vmul.f32 %v2077, %v2165
        %v2167 = vsub.f32 1.0, %v2166
        %v2168 = vmul.f32 %v2165, %v2167
        %v2169 = vadd.f32 %v2165, %v2168
        %vm2170 = vweird.f32 %v2077
        %vm2171 = vweird.f32 %v2165
        %vm2172 = vmor %vm2170, %vm2171
        %v2173 = vsel %vm2172, %v2165, %v2169
        %v2174 = vand.u32 2147483647, %v2077
        %vm2175 = vcmp.eq.f32.partialorder %v2174, 8.507059e+37
        %v2176 = vand.u32 %v2077, 2147483648
        %v2177 = vor.u32 1.1754944e-38, %v2176
        %v2178 = vsel %vm2175, %v2177, %v2173
        %v2179 = vmul.f32 1.0, %v2178
        %v2180 = vrcp.pop %v2078
        %v2181 = vmul.f32 %v2078, %v2180
        %v2182 = vsub.f32 1.0, %v2181
        %v2183 = vmul.f32 %v2180, %v2182
        %v2184 = vadd.f32 %v2180, %v2183
        %vm2185 = vweird.f32 %v2078
        %vm2186 = vweird.f32 %v2180
        %vm2187 = vmor %vm2185, %vm2186
        %v2188 = vsel %vm2187, %v2180, %v2184
        %v2189 = vand.u32 2147483647, %v2078
        %vm2190 = vcmp.eq.f32.partialorder %v2189, 8.507059e+37
        %v2191 = vand.u32 %v2078, 2147483648
        %v2192 = vor.u32 1.1754944e-38, %v2191
        %v2193 = vsel %vm2190, %v2192, %v2188
        %v2194 = vmul.f32 1.0, %v2193
        %v2195 = vrcp.pop %v2079
        %v2196 = vmul.f32 %v2079, %v2195
        %v2197 = vsub.f32 1.0, %v2196
        %v2198 = vmul.f32 %v2195, %v2197
        %v2199 = vadd.f32 %v2195, %v2198
        %vm2200 = vweird.f32 %v2079
        %vm2201 = vweird.f32 %v2195
        %vm2202 = vmor %vm2200, %vm2201
        %v2203 = vsel %vm2202, %v2195, %v2199
        %v2204 = vand.u32 2147483647, %v2079
        %vm2205 = vcmp.eq.f32.partialorder %v2204, 8.507059e+37
        %v2206 = vand.u32 %v2079, 2147483648
        %v2207 = vor.u32 1.1754944e-38, %v2206
        %v2208 = vsel %vm2205, %v2207, %v2203
        %v2209 = vmul.f32 1.0, %v2208
        %v2210 = vrcp.pop %v2080
        %v2211 = vmul.f32 %v2080, %v2210
        %v2212 = vsub.f32 1.0, %v2211
        %v2213 = vmul.f32 %v2210, %v2212
        %v2214 = vadd.f32 %v2210, %v2213
        %vm2215 = vweird.f32 %v2080
        %vm2216 = vweird.f32 %v2210
        %vm2217 = vmor %vm2215, %vm2216
        %v2218 = vsel %vm2217, %v2210, %v2214
        %v2219 = vand.u32 2147483647, %v2080
        %vm2220 = vcmp.eq.f32.partialorder %v2219, 8.507059e+37
        %v2221 = vand.u32 %v2080, 2147483648
        %v2222 = vor.u32 1.1754944e-38, %v2221
        %v2223 = vsel %vm2220, %v2222, %v2218
        %v2224 = vmul.f32 1.0, %v2223
        %v2225 = vrcp.pop %v2081
        %v2226 = vmul.f32 %v2081, %v2225
        %v2227 = vsub.f32 1.0, %v2226
        %v2228 = vmul.f32 %v2225, %v2227
        %v2229 = vadd.f32 %v2225, %v2228
        %vm2230 = vweird.f32 %v2081
        %vm2231 = vweird.f32 %v2225
        %vm2232 = vmor %vm2230, %vm2231
        %v2233 = vsel %vm2232, %v2225, %v2229
        %v2234 = vand.u32 2147483647, %v2081
        %vm2235 = vcmp.eq.f32.partialorder %v2234, 8.507059e+37
        %v2236 = vand.u32 %v2081, 2147483648
        %v2237 = vor.u32 1.1754944e-38, %v2236
        %v2238 = vsel %vm2235, %v2237, %v2233
        %v2239 = vmul.f32 1.0, %v2238
        %v2240 = vrcp.pop %v2082
        %v2241 = vmul.f32 %v2082, %v2240
        %v2242 = vsub.f32 1.0, %v2241
        %v2243 = vmul.f32 %v2240, %v2242
        %v2244 = vadd.f32 %v2240, %v2243
        %vm2245 = vweird.f32 %v2082
        %vm2246 = vweird.f32 %v2240
        %vm2247 = vmor %vm2245, %vm2246
        %v2248 = vsel %vm2247, %v2240, %v2244
        %v2249 = vand.u32 2147483647, %v2082
        %vm2250 = vcmp.eq.f32.partialorder %v2249, 8.507059e+37
        %v2251 = vand.u32 %v2082, 2147483648
        %v2252 = vor.u32 1.1754944e-38, %v2251
        %v2253 = vsel %vm2250, %v2252, %v2248
        %v2254 = vmul.f32 1.0, %v2253
        %v2255 = vrcp.pop %v2083
        %v2256 = vmul.f32 %v2083, %v2255
        %v2257 = vsub.f32 1.0, %v2256
        %v2258 = vmul.f32 %v2255, %v2257
        %v2259 = vadd.f32 %v2255, %v2258
        %vm2260 = vweird.f32 %v2083
        %vm2261 = vweird.f32 %v2255
        %vm2262 = vmor %vm2260, %vm2261
        %v2263 = vsel %vm2262, %v2255, %v2259
        %v2264 = vand.u32 2147483647, %v2083
        %vm2265 = vcmp.eq.f32.partialorder %v2264, 8.507059e+37
        %v2266 = vand.u32 %v2083, 2147483648
        %v2267 = vor.u32 1.1754944e-38, %v2266
        %v2268 = vsel %vm2265, %v2267, %v2263
        %v2269 = vmul.f32 1.0, %v2268
        %v2270 = vrcp.pop %v2084
        %v2271 = vmul.f32 %v2084, %v2270
        %v2272 = vsub.f32 1.0, %v2271
        %v2273 = vmul.f32 %v2270, %v2272
        %v2274 = vadd.f32 %v2270, %v2273
        %vm2275 = vweird.f32 %v2084
        %vm2276 = vweird.f32 %v2270
        %vm2277 = vmor %vm2275, %vm2276
        %v2278 = vsel %vm2277, %v2270, %v2274
        %v2279 = vand.u32 2147483647, %v2084
        %vm2280 = vcmp.eq.f32.partialorder %v2279, 8.507059e+37
        %v2281 = vand.u32 %v2084, 2147483648
        %v2282 = vor.u32 1.1754944e-38, %v2281
        %v2283 = vsel %vm2280, %v2282, %v2278
        %v2284 = vmul.f32 1.0, %v2283
        %v2285 = vrcp.pop %v2085
        %v2286 = vmul.f32 %v2085, %v2285
        %v2287 = vsub.f32 1.0, %v2286
        %v2288 = vmul.f32 %v2285, %v2287
        %v2289 = vadd.f32 %v2285, %v2288
        %vm2290 = vweird.f32 %v2085
        %vm2291 = vweird.f32 %v2285
        %vm2292 = vmor %vm2290, %vm2291
        %v2293 = vsel %vm2292, %v2285, %v2289
        %v2294 = vand.u32 2147483647, %v2085
        %vm2295 = vcmp.eq.f32.partialorder %v2294, 8.507059e+37
        %v2296 = vand.u32 %v2085, 2147483648
        %v2297 = vor.u32 1.1754944e-38, %v2296
        %v2298 = vsel %vm2295, %v2297, %v2293
        %v2299 = vmul.f32 1.0, %v2298
        %v2300 = vrcp.pop %v2086
        %v2301 = vmul.f32 %v2086, %v2300
        %v2302 = vsub.f32 1.0, %v2301
        %v2303 = vmul.f32 %v2300, %v2302
        %v2304 = vadd.f32 %v2300, %v2303
        %vm2305 = vweird.f32 %v2086
        %vm2306 = vweird.f32 %v2300
        %vm2307 = vmor %vm2305, %vm2306
        %v2308 = vsel %vm2307, %v2300, %v2304
        %v2309 = vand.u32 2147483647, %v2086
        %vm2310 = vcmp.eq.f32.partialorder %v2309, 8.507059e+37
        %v2311 = vand.u32 %v2086, 2147483648
        %v2312 = vor.u32 1.1754944e-38, %v2311
        %v2313 = vsel %vm2310, %v2312, %v2308
        %v2314 = vmul.f32 1.0, %v2313
        %v2315 = vrcp.pop %v2087
        %v2316 = vmul.f32 %v2087, %v2315
        %v2317 = vsub.f32 1.0, %v2316
        %v2318 = vmul.f32 %v2315, %v2317
        %v2319 = vadd.f32 %v2315, %v2318
        %vm2320 = vweird.f32 %v2087
        %vm2321 = vweird.f32 %v2315
        %vm2322 = vmor %vm2320, %vm2321
        %v2323 = vsel %vm2322, %v2315, %v2319
        %v2324 = vand.u32 2147483647, %v2087
        %vm2325 = vcmp.eq.f32.partialorder %v2324, 8.507059e+37
        %v2326 = vand.u32 %v2087, 2147483648
        %v2327 = vor.u32 1.1754944e-38, %v2326
        %v2328 = vsel %vm2325, %v2327, %v2323
        %v2329 = vmul.f32 1.0, %v2328
        %v2330 = vrcp.pop %v2088
        %v2331 = vmul.f32 %v2088, %v2330
        %v2332 = vsub.f32 1.0, %v2331
        %v2333 = vmul.f32 %v2330, %v2332
        %v2334 = vadd.f32 %v2330, %v2333
        %vm2335 = vweird.f32 %v2088
        %vm2336 = vweird.f32 %v2330
        %vm2337 = vmor %vm2335, %vm2336
        %v2338 = vsel %vm2337, %v2330, %v2334
        %v2339 = vand.u32 2147483647, %v2088
        %vm2340 = vcmp.eq.f32.partialorder %v2339, 8.507059e+37
        %v2341 = vand.u32 %v2088, 2147483648
        %v2342 = vor.u32 1.1754944e-38, %v2341
        %v2343 = vsel %vm2340, %v2342, %v2338
        %v2344 = vmul.f32 1.0, %v2343
        %v2345 = vrcp.pop %v2089
        %v2346 = vmul.f32 %v2089, %v2345
        %v2347 = vsub.f32 1.0, %v2346
        %v2348 = vmul.f32 %v2345, %v2347
        %v2349 = vadd.f32 %v2345, %v2348
        %vm2350 = vweird.f32 %v2089
        %vm2351 = vweird.f32 %v2345
        %vm2352 = vmor %vm2350, %vm2351
        %v2353 = vsel %vm2352, %v2345, %v2349
        %v2354 = vand.u32 2147483647, %v2089
        %vm2355 = vcmp.eq.f32.partialorder %v2354, 8.507059e+37
        %v2356 = vand.u32 %v2089, 2147483648
        %v2357 = vor.u32 1.1754944e-38, %v2356
        %v2358 = vsel %vm2355, %v2357, %v2353
        %v2359 = vmul.f32 1.0, %v2358
        %v2360 = vrcp.pop %v2090
        %v2361 = vmul.f32 %v2090, %v2360
        %v2362 = vsub.f32 1.0, %v2361
        %v2363 = vmul.f32 %v2360, %v2362
        %v2364 = vadd.f32 %v2360, %v2363
        %vm2365 = vweird.f32 %v2090
        %vm2366 = vweird.f32 %v2360
        %vm2367 = vmor %vm2365, %vm2366
        %v2368 = vsel %vm2367, %v2360, %v2364
        %v2369 = vand.u32 2147483647, %v2090
        %vm2370 = vcmp.eq.f32.partialorder %v2369, 8.507059e+37
        %v2371 = vand.u32 %v2090, 2147483648
        %v2372 = vor.u32 1.1754944e-38, %v2371
        %v2373 = vsel %vm2370, %v2372, %v2368
        %v2374 = vmul.f32 1.0, %v2373
        %v2375 = vrcp.pop %v2091
        %v2376 = vmul.f32 %v2091, %v2375
        %v2377 = vsub.f32 1.0, %v2376
        %v2378 = vmul.f32 %v2375, %v2377
        %v2379 = vadd.f32 %v2375, %v2378
        %vm2380 = vweird.f32 %v2091
        %vm2381 = vweird.f32 %v2375
        %vm2382 = vmor %vm2380, %vm2381
        %v2383 = vsel %vm2382, %v2375, %v2379
        %v2384 = vand.u32 2147483647, %v2091
        %vm2385 = vcmp.eq.f32.partialorder %v2384, 8.507059e+37
        %v2386 = vand.u32 %v2091, 2147483648
        %v2387 = vor.u32 1.1754944e-38, %v2386
        %v2388 = vsel %vm2385, %v2387, %v2383
        %v2389 = vmul.f32 1.0, %v2388
        %v2390 = vrcp.pop %v2092
        %v2391 = vmul.f32 %v2092, %v2390
        %v2392 = vsub.f32 1.0, %v2391
        %v2393 = vmul.f32 %v2390, %v2392
        %v2394 = vadd.f32 %v2390, %v2393
        %vm2395 = vweird.f32 %v2092
        %vm2396 = vweird.f32 %v2390
        %vm2397 = vmor %vm2395, %vm2396
        %v2398 = vsel %vm2397, %v2390, %v2394
        %v2399 = vand.u32 2147483647, %v2092
        %vm2400 = vcmp.eq.f32.partialorder %v2399, 8.507059e+37
        %v2401 = vand.u32 %v2092, 2147483648
        %v2402 = vor.u32 1.1754944e-38, %v2401
        %v2403 = vsel %vm2400, %v2402, %v2398
        %v2404 = vmul.f32 1.0, %v2403
        %v2405 = vrcp.pop %v2093
        %v2406 = vmul.f32 %v2093, %v2405
        %v2407 = vsub.f32 1.0, %v2406
        %v2408 = vmul.f32 %v2405, %v2407
        %v2409 = vadd.f32 %v2405, %v2408
        %vm2410 = vweird.f32 %v2093
        %vm2411 = vweird.f32 %v2405
        %vm2412 = vmor %vm2410, %vm2411
        %v2413 = vsel %vm2412, %v2405, %v2409
        %v2414 = vand.u32 2147483647, %v2093
        %vm2415 = vcmp.eq.f32.partialorder %v2414, 8.507059e+37
        %v2416 = vand.u32 %v2093, 2147483648
        %v2417 = vor.u32 1.1754944e-38, %v2416
        %v2418 = vsel %vm2415, %v2417, %v2413
        %v2419 = vmul.f32 1.0, %v2418
        %v2420 = vrcp.pop %v2094
        %v2421 = vmul.f32 %v2094, %v2420
        %v2422 = vsub.f32 1.0, %v2421
        %v2423 = vmul.f32 %v2420, %v2422
        %v2424 = vadd.f32 %v2420, %v2423
        %vm2425 = vweird.f32 %v2094
        %vm2426 = vweird.f32 %v2420
        %vm2427 = vmor %vm2425, %vm2426
        %v2428 = vsel %vm2427, %v2420, %v2424
        %v2429 = vand.u32 2147483647, %v2094
        %vm2430 = vcmp.eq.f32.partialorder %v2429, 8.507059e+37
        %v2431 = vand.u32 %v2094, 2147483648
        %v2432 = vor.u32 1.1754944e-38, %v2431
        %v2433 = vsel %vm2430, %v2432, %v2428
        %v2434 = vmul.f32 1.0, %v2433
        %v2435 = vrcp.pop %v2095
        %v2436 = vmul.f32 %v2095, %v2435
        %v2437 = vsub.f32 1.0, %v2436
        %v2438 = vmul.f32 %v2435, %v2437
        %v2439 = vadd.f32 %v2435, %v2438
        %vm2440 = vweird.f32 %v2095
        %vm2441 = vweird.f32 %v2435
        %vm2442 = vmor %vm2440, %vm2441
        %v2443 = vsel %vm2442, %v2435, %v2439
        %v2444 = vand.u32 2147483647, %v2095
        %vm2445 = vcmp.eq.f32.partialorder %v2444, 8.507059e+37
        %v2446 = vand.u32 %v2095, 2147483648
        %v2447 = vor.u32 1.1754944e-38, %v2446
        %v2448 = vsel %vm2445, %v2447, %v2443
        %v2449 = vmul.f32 1.0, %v2448
        %v2450 = vrcp.pop %v2096
        %v2451 = vmul.f32 %v2096, %v2450
        %v2452 = vsub.f32 1.0, %v2451
        %v2453 = vmul.f32 %v2450, %v2452
        %v2454 = vadd.f32 %v2450, %v2453
        %vm2455 = vweird.f32 %v2096
        %vm2456 = vweird.f32 %v2450
        %vm2457 = vmor %vm2455, %vm2456
        %v2458 = vsel %vm2457, %v2450, %v2454
        %v2459 = vand.u32 2147483647, %v2096
        %vm2460 = vcmp.eq.f32.partialorder %v2459, 8.507059e+37
        %v2461 = vand.u32 %v2096, 2147483648
        %v2462 = vor.u32 1.1754944e-38, %v2461
        %v2463 = vsel %vm2460, %v2462, %v2458
        %v2464 = vmul.f32 1.0, %v2463
        %v2465 = vrcp.pop %v2097
        %v2466 = vmul.f32 %v2097, %v2465
        %v2467 = vsub.f32 1.0, %v2466
        %v2468 = vmul.f32 %v2465, %v2467
        %v2469 = vadd.f32 %v2465, %v2468
        %vm2470 = vweird.f32 %v2097
        %vm2471 = vweird.f32 %v2465
        %vm2472 = vmor %vm2470, %vm2471
        %v2473 = vsel %vm2472, %v2465, %v2469
        %v2474 = vand.u32 2147483647, %v2097
        %vm2475 = vcmp.eq.f32.partialorder %v2474, 8.507059e+37
        %v2476 = vand.u32 %v2097, 2147483648
        %v2477 = vor.u32 1.1754944e-38, %v2476
        %v2478 = vsel %vm2475, %v2477, %v2473
        %v2479 = vmul.f32 1.0, %v2478
        %v2480 = vrcp.pop %v2098
        %v2481 = vmul.f32 %v2098, %v2480
        %v2482 = vsub.f32 1.0, %v2481
        %v2483 = vmul.f32 %v2480, %v2482
        %v2484 = vadd.f32 %v2480, %v2483
        %vm2485 = vweird.f32 %v2098
        %vm2486 = vweird.f32 %v2480
        %vm2487 = vmor %vm2485, %vm2486
        %v2488 = vsel %vm2487, %v2480, %v2484
        %v2489 = vand.u32 2147483647, %v2098
        %vm2490 = vcmp.eq.f32.partialorder %v2489, 8.507059e+37
        %v2491 = vand.u32 %v2098, 2147483648
        %v2492 = vor.u32 1.1754944e-38, %v2491
        %v2493 = vsel %vm2490, %v2492, %v2488
        %v2494 = vmul.f32 1.0, %v2493
        %v2495 = vrcp.pop %v2099
        %v2496 = vmul.f32 %v2099, %v2495
        %v2497 = vsub.f32 1.0, %v2496
        %v2498 = vmul.f32 %v2495, %v2497
        %v2499 = vadd.f32 %v2495, %v2498
        %vm2500 = vweird.f32 %v2099
        %vm2501 = vweird.f32 %v2495
        %vm2502 = vmor %vm2500, %vm2501
        %v2503 = vsel %vm2502, %v2495, %v2499
        %v2504 = vand.u32 2147483647, %v2099
        %vm2505 = vcmp.eq.f32.partialorder %v2504, 8.507059e+37
        %v2506 = vand.u32 %v2099, 2147483648
        %v2507 = vor.u32 1.1754944e-38, %v2506
        %v2508 = vsel %vm2505, %v2507, %v2503
        %v2509 = vmul.f32 1.0, %v2508
        %v2510 = vrcp.pop %v2100
        %v2511 = vmul.f32 %v2100, %v2510
        %v2512 = vsub.f32 1.0, %v2511
        %v2513 = vmul.f32 %v2510, %v2512
        %v2514 = vadd.f32 %v2510, %v2513
        %vm2515 = vweird.f32 %v2100
        %vm2516 = vweird.f32 %v2510
        %vm2517 = vmor %vm2515, %vm2516
        %v2518 = vsel %vm2517, %v2510, %v2514
        %v2519 = vand.u32 2147483647, %v2100
        %vm2520 = vcmp.eq.f32.partialorder %v2519, 8.507059e+37
        %v2521 = vand.u32 %v2100, 2147483648
        %v2522 = vor.u32 1.1754944e-38, %v2521
        %v2523 = vsel %vm2520, %v2522, %v2518
        %v2524 = vmul.f32 1.0, %v2523
        %v2525 = vrcp.pop %v2101
        %v2526 = vmul.f32 %v2101, %v2525
        %v2527 = vsub.f32 1.0, %v2526
        %v2528 = vmul.f32 %v2525, %v2527
        %v2529 = vadd.f32 %v2525, %v2528
        %vm2530 = vweird.f32 %v2101
        %vm2531 = vweird.f32 %v2525
        %vm2532 = vmor %vm2530, %vm2531
        %v2533 = vsel %vm2532, %v2525, %v2529
        %v2534 = vand.u32 2147483647, %v2101
        %vm2535 = vcmp.eq.f32.partialorder %v2534, 8.507059e+37
        %v2536 = vand.u32 %v2101, 2147483648
        %v2537 = vor.u32 1.1754944e-38, %v2536
        %v2538 = vsel %vm2535, %v2537, %v2533
        %v2539 = vmul.f32 1.0, %v2538
        %v2540 = vrcp.pop %v2102
        %v2541 = vmul.f32 %v2102, %v2540
        %v2542 = vsub.f32 1.0, %v2541
        %v2543 = vmul.f32 %v2540, %v2542
        %v2544 = vadd.f32 %v2540, %v2543
        %vm2545 = vweird.f32 %v2102
        %vm2546 = vweird.f32 %v2540
        %vm2547 = vmor %vm2545, %vm2546
        %v2548 = vsel %vm2547, %v2540, %v2544
        %v2549 = vand.u32 2147483647, %v2102
        %vm2550 = vcmp.eq.f32.partialorder %v2549, 8.507059e+37
        %v2551 = vand.u32 %v2102, 2147483648
        %v2552 = vor.u32 1.1754944e-38, %v2551
        %v2553 = vsel %vm2550, %v2552, %v2548
        %v2554 = vmul.f32 1.0, %v2553
        %v2555 = vrcp.pop %v2103
        %v2556 = vmul.f32 %v2103, %v2555
        %v2557 = vsub.f32 1.0, %v2556
        %v2558 = vmul.f32 %v2555, %v2557
        %v2559 = vadd.f32 %v2555, %v2558
        %vm2560 = vweird.f32 %v2103
        %vm2561 = vweird.f32 %v2555
        %vm2562 = vmor %vm2560, %vm2561
        %v2563 = vsel %vm2562, %v2555, %v2559
        %v2564 = vand.u32 2147483647, %v2103
        %vm2565 = vcmp.eq.f32.partialorder %v2564, 8.507059e+37
        %v2566 = vand.u32 %v2103, 2147483648
        %v2567 = vor.u32 1.1754944e-38, %v2566
        %v2568 = vsel %vm2565, %v2567, %v2563
        %v2569 = vmul.f32 1.0, %v2568
        %v2570 = vrcp.pop %v2104
        %v2571 = vmul.f32 %v2104, %v2570
        %v2572 = vsub.f32 1.0, %v2571
        %v2573 = vmul.f32 %v2570, %v2572
        %v2574 = vadd.f32 %v2570, %v2573
        %vm2575 = vweird.f32 %v2104
        %vm2576 = vweird.f32 %v2570
        %vm2577 = vmor %vm2575, %vm2576
        %v2578 = vsel %vm2577, %v2570, %v2574
        %v2579 = vand.u32 2147483647, %v2104
        %vm2580 = vcmp.eq.f32.partialorder %v2579, 8.507059e+37
        %v2581 = vand.u32 %v2104, 2147483648
        %v2582 = vor.u32 1.1754944e-38, %v2581
        %v2583 = vsel %vm2580, %v2582, %v2578
        %v2584 = vmul.f32 1.0, %v2583
        %2585 = vst.msk [vmem:[%s442] sm:$0xff] %vm506, %v2119
        %2586 = vst.msk [vmem:[%s442 + $0x8] sm:$0xff] %vm506, %v2134
        %2587 = vst.msk [vmem:[%s442 + $0x10] sm:$0xff] %vm506, %v2149
        %2588 = vst.msk [vmem:[%s442 + $0x18] sm:$0xff] %vm506, %v2164
        %2589 = vst.msk [vmem:[%s442 + $0x20] sm:$0xff] %vm506, %v2179
        %2590 = vst.msk [vmem:[%s442 + $0x28] sm:$0xff] %vm506, %v2194
        %2591 = vst.msk [vmem:[%s442 + $0x30] sm:$0xff] %vm506, %v2209
        %2592 = vst.msk [vmem:[%s442 + $0x38] sm:$0xff] %vm506, %v2224
        %2593 = vst.msk [vmem:[%s442 + $0x40] sm:$0xff] %vm506, %v2239
        %2594 = vst.msk [vmem:[%s442 + $0x48] sm:$0xff] %vm506, %v2254
        %2595 = vst.msk [vmem:[%s442 + $0x50] sm:$0xff] %vm506, %v2269
        %2596 = vst.msk [vmem:[%s442 + $0x58] sm:$0xff] %vm506, %v2284
        %2597 = vst.msk [vmem:[%s442 + $0x60] sm:$0xff] %vm506, %v2299
        %2598 = vst.msk [vmem:[%s442 + $0x68] sm:$0xff] %vm506, %v2314
        %2599 = vst.msk [vmem:[%s442 + $0x70] sm:$0xff] %vm506, %v2329
        %2600 = vst.msk [vmem:[%s442 + $0x78] sm:$0xff] %vm506, %v2344
        %2601 = vst.msk [vmem:[%s442 + $0x80] sm:$0xff] %vm506, %v2359
        %2602 = vst.msk [vmem:[%s442 + $0x88] sm:$0xff] %vm506, %v2374
        %2603 = vst.msk [vmem:[%s442 + $0x90] sm:$0xff] %vm506, %v2389
        %2604 = vst.msk [vmem:[%s442 + $0x98] sm:$0xff] %vm506, %v2404
        %2605 = vst.msk [vmem:[%s442 + $0xa0] sm:$0xff] %vm506, %v2419
        %2606 = vst.msk [vmem:[%s442 + $0xa8] sm:$0xff] %vm506, %v2434
        %2607 = vst.msk [vmem:[%s442 + $0xb0] sm:$0xff] %vm506, %v2449
        %2608 = vst.msk [vmem:[%s442 + $0xb8] sm:$0xff] %vm506, %v2464
        %2609 = vst.msk [vmem:[%s442 + $0xc0] sm:$0xff] %vm506, %v2479
        %2610 = vst.msk [vmem:[%s442 + $0xc8] sm:$0xff] %vm506, %v2494
        %2611 = vst.msk [vmem:[%s442 + $0xd0] sm:$0xff] %vm506, %v2509
        %2612 = vst.msk [vmem:[%s442 + $0xd8] sm:$0xff] %vm506, %v2524
        %2613 = vst.msk [vmem:[%s442 + $0xe0] sm:$0xff] %vm506, %v2539
        %2614 = vst.msk [vmem:[%s442 + $0xe8] sm:$0xff] %vm506, %v2554
        %2615 = vst.msk [vmem:[%s442 + $0xf0] sm:$0xff] %vm506, %v2569
        %2616 = vst.msk [vmem:[%s442 + $0xf8] sm:$0xff] %vm506, %v2584
        %s2617 = sand.u32 %s310, 1
        %s2618 = sand.u32 %s310, 1
        %s2619 = smul.addr %s2618, 256
        %s2620 = scalar_lea.vmem [#allocation2], %s2619
        // Predicated region
        $region73: #{tpu_custom_call.1} parent=71 // pred_check
          %p2621 = pneg %p320
        $region74: #{tpu_custom_call.1} parent=71 // pred_check_branch
          %2623 = sbr.rel (%p2621) target = $region76
        $region75: #{tpu_custom_call.1} parent=71 // pred_region
          %s2624 = smul.u32 32, %s24
          %s2625 = ssub.s32 38, %s2624
          %p2626 = scmp.lt.s32.totalorder %s2625, 32
          %s2627 = scalar_select %p2626, %s2625, 32
          %s2628 = smul.u32 8, %s2627
          %p2629 = scmp.ne.s32.totalorder 0, %s2628
          %s2630 = smul.addr %s2624, 8
          %s2631 = scalar_lea.vmem %s13, %s2630
          // Predicated region
          $region77: #{tpu_custom_call.1} parent=75 // pred_check
            %p2632 = pneg %p2629
          $region78: #{tpu_custom_call.1} parent=75 // pred_check_branch
            %2634 = sbr.rel (%p2632) target = $region80
          $region79: #{tpu_custom_call.1} parent=75 // pred_region
            // Predicated region
            $region81: #{tpu_custom_call.1} parent=79 // pred_check
              _
            $region82: #{tpu_custom_call.1} parent=79 // pred_check_branch
              %2636 = sbr.rel (0) target = $region84
            $region83: #{tpu_custom_call.1} parent=79 // pred_region
              // Predicated region
              $region103: #{tpu_custom_call.1} parent=83 // pred_check
                _
              $region104: #{tpu_custom_call.1} parent=83 // pred_check_branch
                %2748 = sbr.rel (0) target = $region106
              $region105: #{tpu_custom_call.1} parent=83 // pred_region
                %s2749 = sshrl.u32 %s2627, 5
                // While loop
                $region107: #{tpu_custom_call.1} parent=105 // loop_pre_header
                  _
                $region108: #{tpu_custom_call.1} parent=105 // loop_header
                  %s2751 = sphi 0, %s2753
                  %p2752 = scmp.ge.s32.totalorder %s2751, %s2749
                  %s2756 = sphi 0, %s2825
                  %s2757 = sphi %s2620, %s2828
                  %s2758 = sphi %s2631, %s2829
                $region109: #{tpu_custom_call.1} parent=105 // loop_header_branch
                  %2755 = sbr.rel (%p2752) target = $region113
                $region110: #{tpu_custom_call.1} parent=105 // loop_body
                  %v2759 = vld [vmem:[%s2757] sm:$0xff]
                  %2760 = vst [vmem:[%s2758] sm:$0xff] %v2759
                  %v2761 = vld [vmem:[%s2757 + $0x8] sm:$0xff]
                  %2762 = vst [vmem:[%s2758 + $0x8] sm:$0xff] %v2761
                  %v2763 = vld [vmem:[%s2757 + $0x10] sm:$0xff]
                  %2764 = vst [vmem:[%s2758 + $0x10] sm:$0xff] %v2763
                  %v2765 = vld [vmem:[%s2757 + $0x18] sm:$0xff]
                  %2766 = vst [vmem:[%s2758 + $0x18] sm:$0xff] %v2765
                  %v2767 = vld [vmem:[%s2757 + $0x20] sm:$0xff]
                  %2768 = vst [vmem:[%s2758 + $0x20] sm:$0xff] %v2767
                  %v2769 = vld [vmem:[%s2757 + $0x28] sm:$0xff]
                  %2770 = vst [vmem:[%s2758 + $0x28] sm:$0xff] %v2769
                  %v2771 = vld [vmem:[%s2757 + $0x30] sm:$0xff]
                  %2772 = vst [vmem:[%s2758 + $0x30] sm:$0xff] %v2771
                  %v2773 = vld [vmem:[%s2757 + $0x38] sm:$0xff]
                  %2774 = vst [vmem:[%s2758 + $0x38] sm:$0xff] %v2773
                  %v2775 = vld [vmem:[%s2757 + $0x40] sm:$0xff]
                  %2776 = vst [vmem:[%s2758 + $0x40] sm:$0xff] %v2775
                  %v2777 = vld [vmem:[%s2757 + $0x48] sm:$0xff]
                  %2778 = vst [vmem:[%s2758 + $0x48] sm:$0xff] %v2777
                  %v2779 = vld [vmem:[%s2757 + $0x50] sm:$0xff]
                  %2780 = vst [vmem:[%s2758 + $0x50] sm:$0xff] %v2779
                  %v2781 = vld [vmem:[%s2757 + $0x58] sm:$0xff]
                  %2782 = vst [vmem:[%s2758 + $0x58] sm:$0xff] %v2781
                  %v2783 = vld [vmem:[%s2757 + $0x60] sm:$0xff]
                  %2784 = vst [vmem:[%s2758 + $0x60] sm:$0xff] %v2783
                  %v2785 = vld [vmem:[%s2757 + $0x68] sm:$0xff]
                  %2786 = vst [vmem:[%s2758 + $0x68] sm:$0xff] %v2785
                  %v2787 = vld [vmem:[%s2757 + $0x70] sm:$0xff]
                  %2788 = vst [vmem:[%s2758 + $0x70] sm:$0xff] %v2787
                  %v2789 = vld [vmem:[%s2757 + $0x78] sm:$0xff]
                  %2790 = vst [vmem:[%s2758 + $0x78] sm:$0xff] %v2789
                  %v2791 = vld [vmem:[%s2757 + $0x80] sm:$0xff]
                  %2792 = vst [vmem:[%s2758 + $0x80] sm:$0xff] %v2791
                  %v2793 = vld [vmem:[%s2757 + $0x88] sm:$0xff]
                  %2794 = vst [vmem:[%s2758 + $0x88] sm:$0xff] %v2793
                  %v2795 = vld [vmem:[%s2757 + $0x90] sm:$0xff]
                  %2796 = vst [vmem:[%s2758 + $0x90] sm:$0xff] %v2795
                  %v2797 = vld [vmem:[%s2757 + $0x98] sm:$0xff]
                  %2798 = vst [vmem:[%s2758 + $0x98] sm:$0xff] %v2797
                  %v2799 = vld [vmem:[%s2757 + $0xa0] sm:$0xff]
                  %2800 = vst [vmem:[%s2758 + $0xa0] sm:$0xff] %v2799
                  %v2801 = vld [vmem:[%s2757 + $0xa8] sm:$0xff]
                  %2802 = vst [vmem:[%s2758 + $0xa8] sm:$0xff] %v2801
                  %v2803 = vld [vmem:[%s2757 + $0xb0] sm:$0xff]
                  %2804 = vst [vmem:[%s2758 + $0xb0] sm:$0xff] %v2803
                  %v2805 = vld [vmem:[%s2757 + $0xb8] sm:$0xff]
                  %2806 = vst [vmem:[%s2758 + $0xb8] sm:$0xff] %v2805
                  %v2807 = vld [vmem:[%s2757 + $0xc0] sm:$0xff]
                  %2808 = vst [vmem:[%s2758 + $0xc0] sm:$0xff] %v2807
                  %v2809 = vld [vmem:[%s2757 + $0xc8] sm:$0xff]
                  %2810 = vst [vmem:[%s2758 + $0xc8] sm:$0xff] %v2809
                  %v2811 = vld [vmem:[%s2757 + $0xd0] sm:$0xff]
                  %2812 = vst [vmem:[%s2758 + $0xd0] sm:$0xff] %v2811
                  %v2813 = vld [vmem:[%s2757 + $0xd8] sm:$0xff]
                  %2814 = vst [vmem:[%s2758 + $0xd8] sm:$0xff] %v2813
                  %v2815 = vld [vmem:[%s2757 + $0xe0] sm:$0xff]
                  %2816 = vst [vmem:[%s2758 + $0xe0] sm:$0xff] %v2815
                  %v2817 = vld [vmem:[%s2757 + $0xe8] sm:$0xff]
                  %2818 = vst [vmem:[%s2758 + $0xe8] sm:$0xff] %v2817
                  %v2819 = vld [vmem:[%s2757 + $0xf0] sm:$0xff]
                  %2820 = vst [vmem:[%s2758 + $0xf0] sm:$0xff] %v2819
                  %v2821 = vld [vmem:[%s2757 + $0xf8] sm:$0xff]
                  %2822 = vst [vmem:[%s2758 + $0xf8] sm:$0xff] %v2821
                  %s2823 = sadd.s32 1, %s2756
                  %p2824 = scmp.ge.s32.totalorder %s2823, %s2749
                  %s2825 = scalar_select %p2824, 0, %s2823
                  %s2826 = smul.u32 %s2825, 256
                  %s2827 = smul.u32 %s2825, 256
                  %s2828 = scalar_lea.vmem %s2620, %s2826 [#allocation2]
                  %s2829 = scalar_lea.vmem %s2631, %s2827
                $region111: #{tpu_custom_call.1} parent=105 // loop_footer
                  %s2753 = sadd.s32 %s2751, 1
                $region112: #{tpu_custom_call.1} parent=105 // loop_footer_branch
                  %2750 = sbr.rel target = $region108
                $region113: #{tpu_custom_call.1} parent=105 // loop_exit
                  _
                %s2830 = sshrl.u32 %s2627, 5
                %s2831 = sand.u32 %s2627, 31
                %s2832 = smul.u32 %s2830, 32
                %s2833 = smul.u32 8, %s2832
                %s2834 = scalar_lea.vmem %s2620, %s2833 [#allocation2]
                %s2835 = smul.u32 8, %s2832
                %s2836 = scalar_lea.vmem %s2631, %s2835
                // While loop
                $region114: #{tpu_custom_call.1} parent=105 // loop_pre_header
                  _
                $region115: #{tpu_custom_call.1} parent=105 // loop_header
                  %s2838 = sphi 0, %s2840
                  %p2839 = scmp.ge.s32.totalorder %s2838, %s2831
                  %s2843 = sphi 0, %s2850
                  %s2844 = sphi %s2834, %s2853
                  %s2845 = sphi %s2836, %s2854
                $region116: #{tpu_custom_call.1} parent=105 // loop_header_branch
                  %2842 = sbr.rel (%p2839) target = $region120
                $region117: #{tpu_custom_call.1} parent=105 // loop_body
                  %v2846 = vld [vmem:[%s2844] sm:$0xff]
                  %2847 = vst [vmem:[%s2845] sm:$0xff] %v2846
                  %s2848 = sadd.s32 1, %s2843
                  %p2849 = scmp.ge.s32.totalorder %s2848, %s2831
                  %s2850 = scalar_select %p2849, 0, %s2848
                  %s2851 = smul.u32 %s2850, 8
                  %s2852 = smul.u32 %s2850, 8
                  %s2853 = scalar_lea.vmem %s2834, %s2851 [#allocation2]
                  %s2854 = scalar_lea.vmem %s2836, %s2852
                $region118: #{tpu_custom_call.1} parent=105 // loop_footer
                  %s2840 = sadd.s32 %s2838, 1
                $region119: #{tpu_custom_call.1} parent=105 // loop_footer_branch
                  %2837 = sbr.rel target = $region115
                $region120: #{tpu_custom_call.1} parent=105 // loop_exit
                  _
              $region106: #{tpu_custom_call.1} parent=83 // pred_fallthru
                _
              // Predicated region
              $region121: #{tpu_custom_call.1} parent=83 // pred_check
                _
              $region122: #{tpu_custom_call.1} parent=83 // pred_check_branch
                %2856 = sbr.rel target = $region124
              $region123: #{tpu_custom_call.1} parent=83 // pred_region
                _
              $region124: #{tpu_custom_call.1} parent=83 // pred_fallthru
                _
            $region84: #{tpu_custom_call.1} parent=79 // pred_fallthru
              _
            // Predicated region
            $region85: #{tpu_custom_call.1} parent=79 // pred_check
              _
            $region86: #{tpu_custom_call.1} parent=79 // pred_check_branch
              %2638 = sbr.rel target = $region88
            $region87: #{tpu_custom_call.1} parent=79 // pred_region
              %s2640 = ssub.s32 256, 1
              %s2641 = sshrl.u32 %s2627, 5
              // While loop
              $region89: #{tpu_custom_call.1} parent=87 // loop_pre_header
                _
              $region90: #{tpu_custom_call.1} parent=87 // loop_header
                %s2643 = sphi 0, %s2645
                %p2644 = scmp.ge.s32.totalorder %s2643, %s2641
                %s2648 = sphi 0, %s2717
                %s2649 = sphi %s2620, %s2720
                %s2650 = sphi %s2631, %s2721
              $region91: #{tpu_custom_call.1} parent=87 // loop_header_branch
                %2647 = sbr.rel (%p2644) target = $region95
              $region92: #{tpu_custom_call.1} parent=87 // loop_body
                %v2651 = vld [vmem:[%s2649] sm:%s2640]
                %2652 = vst [vmem:[%s2650] sm:%s2640] %v2651
                %v2653 = vld [vmem:[%s2649 + $0x8] sm:%s2640]
                %2654 = vst [vmem:[%s2650 + $0x8] sm:%s2640] %v2653
                %v2655 = vld [vmem:[%s2649 + $0x10] sm:%s2640]
                %2656 = vst [vmem:[%s2650 + $0x10] sm:%s2640] %v2655
                %v2657 = vld [vmem:[%s2649 + $0x18] sm:%s2640]
                %2658 = vst [vmem:[%s2650 + $0x18] sm:%s2640] %v2657
                %v2659 = vld [vmem:[%s2649 + $0x20] sm:%s2640]
                %2660 = vst [vmem:[%s2650 + $0x20] sm:%s2640] %v2659
                %v2661 = vld [vmem:[%s2649 + $0x28] sm:%s2640]
                %2662 = vst [vmem:[%s2650 + $0x28] sm:%s2640] %v2661
                %v2663 = vld [vmem:[%s2649 + $0x30] sm:%s2640]
                %2664 = vst [vmem:[%s2650 + $0x30] sm:%s2640] %v2663
                %v2665 = vld [vmem:[%s2649 + $0x38] sm:%s2640]
                %2666 = vst [vmem:[%s2650 + $0x38] sm:%s2640] %v2665
                %v2667 = vld [vmem:[%s2649 + $0x40] sm:%s2640]
                %2668 = vst [vmem:[%s2650 + $0x40] sm:%s2640] %v2667
                %v2669 = vld [vmem:[%s2649 + $0x48] sm:%s2640]
                %2670 = vst [vmem:[%s2650 + $0x48] sm:%s2640] %v2669
                %v2671 = vld [vmem:[%s2649 + $0x50] sm:%s2640]
                %2672 = vst [vmem:[%s2650 + $0x50] sm:%s2640] %v2671
                %v2673 = vld [vmem:[%s2649 + $0x58] sm:%s2640]
                %2674 = vst [vmem:[%s2650 + $0x58] sm:%s2640] %v2673
                %v2675 = vld [vmem:[%s2649 + $0x60] sm:%s2640]
                %2676 = vst [vmem:[%s2650 + $0x60] sm:%s2640] %v2675
                %v2677 = vld [vmem:[%s2649 + $0x68] sm:%s2640]
                %2678 = vst [vmem:[%s2650 + $0x68] sm:%s2640] %v2677
                %v2679 = vld [vmem:[%s2649 + $0x70] sm:%s2640]
                %2680 = vst [vmem:[%s2650 + $0x70] sm:%s2640] %v2679
                %v2681 = vld [vmem:[%s2649 + $0x78] sm:%s2640]
                %2682 = vst [vmem:[%s2650 + $0x78] sm:%s2640] %v2681
                %v2683 = vld [vmem:[%s2649 + $0x80] sm:%s2640]
                %2684 = vst [vmem:[%s2650 + $0x80] sm:%s2640] %v2683
                %v2685 = vld [vmem:[%s2649 + $0x88] sm:%s2640]
                %2686 = vst [vmem:[%s2650 + $0x88] sm:%s2640] %v2685
                %v2687 = vld [vmem:[%s2649 + $0x90] sm:%s2640]
                %2688 = vst [vmem:[%s2650 + $0x90] sm:%s2640] %v2687
                %v2689 = vld [vmem:[%s2649 + $0x98] sm:%s2640]
                %2690 = vst [vmem:[%s2650 + $0x98] sm:%s2640] %v2689
                %v2691 = vld [vmem:[%s2649 + $0xa0] sm:%s2640]
                %2692 = vst [vmem:[%s2650 + $0xa0] sm:%s2640] %v2691
                %v2693 = vld [vmem:[%s2649 + $0xa8] sm:%s2640]
                %2694 = vst [vmem:[%s2650 + $0xa8] sm:%s2640] %v2693
                %v2695 = vld [vmem:[%s2649 + $0xb0] sm:%s2640]
                %2696 = vst [vmem:[%s2650 + $0xb0] sm:%s2640] %v2695
                %v2697 = vld [vmem:[%s2649 + $0xb8] sm:%s2640]
                %2698 = vst [vmem:[%s2650 + $0xb8] sm:%s2640] %v2697
                %v2699 = vld [vmem:[%s2649 + $0xc0] sm:%s2640]
                %2700 = vst [vmem:[%s2650 + $0xc0] sm:%s2640] %v2699
                %v2701 = vld [vmem:[%s2649 + $0xc8] sm:%s2640]
                %2702 = vst [vmem:[%s2650 + $0xc8] sm:%s2640] %v2701
                %v2703 = vld [vmem:[%s2649 + $0xd0] sm:%s2640]
                %2704 = vst [vmem:[%s2650 + $0xd0] sm:%s2640] %v2703
                %v2705 = vld [vmem:[%s2649 + $0xd8] sm:%s2640]
                %2706 = vst [vmem:[%s2650 + $0xd8] sm:%s2640] %v2705
                %v2707 = vld [vmem:[%s2649 + $0xe0] sm:%s2640]
                %2708 = vst [vmem:[%s2650 + $0xe0] sm:%s2640] %v2707
                %v2709 = vld [vmem:[%s2649 + $0xe8] sm:%s2640]
                %2710 = vst [vmem:[%s2650 + $0xe8] sm:%s2640] %v2709
                %v2711 = vld [vmem:[%s2649 + $0xf0] sm:%s2640]
                %2712 = vst [vmem:[%s2650 + $0xf0] sm:%s2640] %v2711
                %v2713 = vld [vmem:[%s2649 + $0xf8] sm:%s2640]
                %2714 = vst [vmem:[%s2650 + $0xf8] sm:%s2640] %v2713
                %s2715 = sadd.s32 1, %s2648
                %p2716 = scmp.ge.s32.totalorder %s2715, %s2641
                %s2717 = scalar_select %p2716, 0, %s2715
                %s2718 = smul.u32 %s2717, 256
                %s2719 = smul.u32 %s2717, 256
                %s2720 = scalar_lea.vmem %s2620, %s2718 [#allocation2]
                %s2721 = scalar_lea.vmem %s2631, %s2719
              $region93: #{tpu_custom_call.1} parent=87 // loop_footer
                %s2645 = sadd.s32 %s2643, 1
              $region94: #{tpu_custom_call.1} parent=87 // loop_footer_branch
                %2642 = sbr.rel target = $region90
              $region95: #{tpu_custom_call.1} parent=87 // loop_exit
                _
              %s2722 = sshrl.u32 %s2627, 5
              %s2723 = sand.u32 %s2627, 31
              %s2724 = smul.u32 %s2722, 32
              %s2725 = smul.u32 8, %s2724
              %s2726 = scalar_lea.vmem %s2620, %s2725 [#allocation2]
              %s2727 = smul.u32 8, %s2724
              %s2728 = scalar_lea.vmem %s2631, %s2727
              // While loop
              $region96: #{tpu_custom_call.1} parent=87 // loop_pre_header
                _
              $region97: #{tpu_custom_call.1} parent=87 // loop_header
                %s2730 = sphi 0, %s2732
                %p2731 = scmp.ge.s32.totalorder %s2730, %s2723
                %s2735 = sphi 0, %s2742
                %s2736 = sphi %s2726, %s2745
                %s2737 = sphi %s2728, %s2746
              $region98: #{tpu_custom_call.1} parent=87 // loop_header_branch
                %2734 = sbr.rel (%p2731) target = $region102
              $region99: #{tpu_custom_call.1} parent=87 // loop_body
                %v2738 = vld [vmem:[%s2736] sm:%s2640]
                %2739 = vst [vmem:[%s2737] sm:%s2640] %v2738
                %s2740 = sadd.s32 1, %s2735
                %p2741 = scmp.ge.s32.totalorder %s2740, %s2723
                %s2742 = scalar_select %p2741, 0, %s2740
                %s2743 = smul.u32 %s2742, 8
                %s2744 = smul.u32 %s2742, 8
                %s2745 = scalar_lea.vmem %s2726, %s2743 [#allocation2]
                %s2746 = scalar_lea.vmem %s2728, %s2744
              $region100: #{tpu_custom_call.1} parent=87 // loop_footer
                %s2732 = sadd.s32 %s2730, 1
              $region101: #{tpu_custom_call.1} parent=87 // loop_footer_branch
                %2729 = sbr.rel target = $region97
              $region102: #{tpu_custom_call.1} parent=87 // loop_exit
                _
            $region88: #{tpu_custom_call.1} parent=79 // pred_fallthru
              _
          $region80: #{tpu_custom_call.1} parent=75 // pred_fallthru
            _
          %2857 = vnop
        $region76: #{tpu_custom_call.1} parent=71 // pred_fallthru
          _
      $region72: #{tpu_custom_call.1} parent=5 // pred_fallthru
        _
      %p2858 = scmp.le.s32.totalorder 2, %s19
      // Predicated region
      $region125: #{tpu_custom_call.1} parent=5 // pred_check
        %p2859 = pneg %p2858
      $region126: #{tpu_custom_call.1} parent=5 // pred_check_branch
        %2861 = sbr.rel (%p2859) target = $region128
      $region127: #{tpu_custom_call.1} parent=5 // pred_region
        %s2862 = ssub.s32 %s19, 2
        // Predicated region
        $region129: #{tpu_custom_call.1} parent=127 // pred_check
          %p2863 = pneg %p326
        $region130: #{tpu_custom_call.1} parent=127 // pred_check_branch
          %2865 = sbr.rel (%p2863) target = $region132
        $region131: #{tpu_custom_call.1} parent=127 // pred_region
          %s2866 = sand.u32 %s311, 1
          %s2867 = sand.u32 %s311, 1
          %s2868 = smul.addr %s2867, 256
          %s2869 = scalar_lea.vmem [#allocation2], %s2868
        $region132: #{tpu_custom_call.1} parent=127 // pred_fallthru
          _
      $region128: #{tpu_custom_call.1} parent=5 // pred_fallthru
        _
    $region6: #{tpu_custom_call.1} parent=1 // loop_footer
      %s23 = sadd.s32 1, %s19
    $region7: #{tpu_custom_call.1} parent=1 // loop_footer_branch
      %18 = sbr.rel target = $region3
    $region8: #{tpu_custom_call.1} parent=1 // loop_exit
      _

</llo_original>
